<compile_context>
chip_gen: v7x
topology: tpu7x:2x2x1
jax: 0.10.0
libtpu: 0.0.40
codegen_flags: <defaults>
</compile_context>

<pallas_src>
import functools
import math

import jax
import jax.numpy as jnp
from jax.experimental import pallas as pl
from jax.experimental.pallas import tpu as pltpu

# ---------------------------------------------------------------------------
# Model hyper-parameters (small, consistent with the module's structure).
# ---------------------------------------------------------------------------
NUM_HID = 32          # num_hid
GLIMPSE = 2           # number of heads
HEAD_SIZE = NUM_HID // GLIMPSE
SEQ = 8


def ha_kernel(x_ref, wqkv_ref, bqkv_ref, wf_ref, bf_ref, o_ref, *, bt):
    """HA forward for one batch tile of `bt` sequences."""
    rows = bt * SEQ

    # Flatten (bt, SEQ, NUM_HID) -> (bt*SEQ, NUM_HID): packs rows onto the
    # sublane axis so the projection / fc partials are single 2-D MXU dots.
    # bf16 operands -> single-pass MXU; accumulate in f32.
    x = x_ref[...].reshape(rows, NUM_HID).astype(jnp.bfloat16)

    # Fused k|q|v projection (q columns already carry the 1/sqrt(dk) scale).
    kqv = jnp.dot(x, wqkv_ref[...], preferred_element_type=jnp.float32)
    kqv = kqv + bqkv_ref[...]                                # f32 bias add

    acc = jnp.zeros((rows, NUM_HID), jnp.float32)            # fc accumulator
    for h in range(GLIMPSE):                                  # static, unrolled
        lo = h * HEAD_SIZE
        # Slice each head directly out of the fused kqv slab.
        kh = kqv[:, 0 * NUM_HID + lo: 0 * NUM_HID + lo + HEAD_SIZE]
        qh = kqv[:, 1 * NUM_HID + lo: 1 * NUM_HID + lo + HEAD_SIZE]
        vh = kqv[:, 2 * NUM_HID + lo: 2 * NUM_HID + lo + HEAD_SIZE]
        kh = kh.reshape(bt, SEQ, HEAD_SIZE).astype(jnp.bfloat16)
        qh = qh.reshape(bt, SEQ, HEAD_SIZE).astype(jnp.bfloat16)
        vh = vh.reshape(bt, SEQ, HEAD_SIZE).astype(jnp.bfloat16)

        # scores = q @ k^T (scale already folded into the q projection)
        s = jnp.einsum("bqd,bkd->bqk", qh, kh,
                       preferred_element_type=jnp.float32)    # (bt, SEQ, SEQ)

        # numerically stable softmax in f32; denominator via EUP approx recip
        m = jnp.max(s, axis=-1, keepdims=True)
        p = jnp.exp(s - m)
        p = p * pl.reciprocal(jnp.sum(p, axis=-1, keepdims=True), approx=True)

        # dropout -> identity (inference)
        oh = jnp.einsum("bqk,bkd->bqd", p.astype(jnp.bfloat16), vh,
                        preferred_element_type=jnp.float32)   # (bt, SEQ, HEAD)

        # Fold the final fc into the head loop: this head's contribution is
        # oh @ Wf[head-rows, :]; summed over heads it equals concat(heads) @ Wf.
        acc = acc + jnp.dot(
            oh.reshape(rows, HEAD_SIZE).astype(jnp.bfloat16),
            wf_ref[lo:lo + HEAD_SIZE, :],
            preferred_element_type=jnp.float32)

    out = acc + bf_ref[...]
    o_ref[...] = out.reshape(bt, SEQ, NUM_HID).astype(o_ref.dtype)


def ha_forward(x, fused, *, batch_tile=None):
    """x: (B, SEQ, NUM_HID) f32.  fused: dict with wqkv/bqkv (bf16/f32) etc."""
    B, seq, hid = x.shape
    assert seq == SEQ and hid == NUM_HID

    bt = batch_tile if batch_tile is not None else min(B, 8)
    assert B % bt == 0, "batch must be divisible by batch_tile"
    grid = (B // bt,)

    return pl.pallas_call(
        functools.partial(ha_kernel, bt=bt),
        out_shape=jax.ShapeDtypeStruct((B, SEQ, NUM_HID), x.dtype),
        grid=grid,
        in_specs=[
            pl.BlockSpec((bt, SEQ, NUM_HID), lambda b: (b, 0, 0)),      # x
            pl.BlockSpec((NUM_HID, 3 * NUM_HID), lambda b: (0, 0)),     # wqkv
            pl.BlockSpec((1, 3 * NUM_HID), lambda b: (0, 0)),           # bqkv
            pl.BlockSpec((NUM_HID, NUM_HID), lambda b: (0, 0)),         # wf
            pl.BlockSpec((1, NUM_HID), lambda b: (0, 0)),               # bf
        ],
        out_specs=pl.BlockSpec((bt, SEQ, NUM_HID), lambda b: (b, 0, 0)),
        compiler_params=pltpu.CompilerParams(
            dimension_semantics=("parallel",)),                # batch-parallel
    )(x, fused["wqkv"], fused["bqkv"], fused["wf"], fused["bf"])


def ha_reference(x, params):
    """Pure-JAX f32 reference matching the PyTorch forward (dropout = identity)."""
    bs, seq, hid = x.shape
    k = x @ params["w1"] + params["b1"]
    q = x @ params["w2"] + params["b2"]
    v = x @ params["w3"] + params["b3"]

    def split_heads(t):  # (bs, seq, hid) -> (bs, glimpse, seq, head)
        return t.reshape(bs, seq, GLIMPSE, HEAD_SIZE).transpose(0, 2, 1, 3)

    kh, qh, vh = split_heads(k), split_heads(q), split_heads(v)
    s = jnp.einsum("bgqd,bgkd->bgqk", qh, kh) / math.sqrt(HEAD_SIZE)
    p = jax.nn.softmax(s, axis=-1)
    o = jnp.einsum("bgqk,bgkd->bgqd", p, vh)
    o = o.transpose(0, 2, 1, 3).reshape(bs, seq, hid)
    return o @ params["wf"] + params["bf"]


def init_params(key):
    """PyTorch-Linear-style init: U(-1/sqrt(fan_in), 1/sqrt(fan_in)).

    Weights stored already transposed to (in, out); biases as (1, out)."""
    bound = 1.0 / math.sqrt(NUM_HID)
    keys = jax.random.split(key, 8)
    p = {}
    names = [("w1", "b1"), ("w2", "b2"), ("w3", "b3"), ("wf", "bf")]
    for i, (wn, bn) in enumerate(names):
        p[wn] = jax.random.uniform(keys[2 * i], (NUM_HID, NUM_HID),
                                   jnp.float32, -bound, bound)
        p[bn] = jax.random.uniform(keys[2 * i + 1], (1, NUM_HID),
                                   jnp.float32, -bound, bound)
    return p


def fuse_params(p):
    """One-time (init) fusion: k|q|v weights/biases concatenated, softmax scale
    folded into q, matmul weights pre-cast to bf16 (biases stay f32)."""
    scale = 1.0 / math.sqrt(HEAD_SIZE)
    wqkv = jnp.concatenate([p["w1"], p["w2"] * scale, p["w3"]], axis=1)
    bqkv = jnp.concatenate([p["b1"], p["b2"] * scale, p["b3"]], axis=1)
    return {"wqkv": wqkv.astype(jnp.bfloat16),
            "bqkv": bqkv,
            "wf": p["wf"].astype(jnp.bfloat16),
            "bf": p["bf"]}


if __name__ == "__main__":
    BATCH = 8          # small demo batch; grid = (BATCH // batch_tile,)
    key = jax.random.PRNGKey(0)
    k_x, k_p = jax.random.split(key)

    x = jax.random.normal(k_x, (BATCH, SEQ, NUM_HID), jnp.float32)
    params = init_params(k_p)
    fused = fuse_params(params)

    out = jax.block_until_ready(ha_forward(x, fused, batch_tile=4))
    ref = ha_reference(x, params)

    assert out.shape == (BATCH, SEQ, NUM_HID)
    # tolerance accounts for bf16 MXU operands + EUP approximate reciprocal
    max_err = float(jnp.max(jnp.abs(out - ref)))
    assert jnp.allclose(out, ref, atol=2e-2, rtol=2e-2), (
        f"mismatch vs reference (max abs err {max_err})")

    print("KERNEL_OK")
</pallas_src>

<mosaic_0001>
module attributes {stable_mosaic.version = 11 : i64} {
  func.func @ha_kernel(%arg0: i32, %arg1: memref<4x8x32xf32, #tpu.memory_space<vmem>>, %arg2: memref<32x96xbf16, #tpu.memory_space<vmem>>, %arg3: memref<1x96xf32, #tpu.memory_space<vmem>>, %arg4: memref<32x32xbf16, #tpu.memory_space<vmem>>, %arg5: memref<1x32xf32, #tpu.memory_space<vmem>>, %arg6: memref<4x8x32xf32, #tpu.memory_space<vmem>>) attributes {dimension_semantics = [#tpu.dimension_semantics<parallel>], iteration_bounds = array<i64: 2>, scalar_prefetch = 0 : i64, scratch_operands = 0 : i64, tpu.core_type = #tpu.core_type<tc>, window_params = [{transform_indices = @transform_0, window_bounds = array<i64: 4, 8, 32>}, {pipeline_mode = #tpu.pipeline_mode<synchronous>, transform_indices = @transform_1, window_bounds = array<i64: 32, 96>}, {pipeline_mode = #tpu.pipeline_mode<synchronous>, transform_indices = @transform_2, window_bounds = array<i64: 1, 96>}, {pipeline_mode = #tpu.pipeline_mode<synchronous>, transform_indices = @transform_3, window_bounds = array<i64: 32, 32>}, {pipeline_mode = #tpu.pipeline_mode<synchronous>, transform_indices = @transform_4, window_bounds = array<i64: 1, 32>}, {transform_indices = @transform_5, window_bounds = array<i64: 4, 8, 32>}]} {
    %c0 = arith.constant 0 : index
    %c0_0 = arith.constant 0 : index
    %c0_1 = arith.constant 0 : index
    %0 = vector.load %arg1[%c0, %c0_0, %c0_1] : memref<4x8x32xf32, #tpu.memory_space<vmem>>, vector<4x8x32xf32>
    %1 = vector.shape_cast %0 : vector<4x8x32xf32> to vector<32x32xf32>
    %2 = arith.truncf %1 : vector<32x32xf32> to vector<32x32xbf16>
    %c0_2 = arith.constant 0 : index
    %c0_3 = arith.constant 0 : index
    %3 = vector.load %arg2[%c0_2, %c0_3] : memref<32x96xbf16, #tpu.memory_space<vmem>>, vector<32x96xbf16>
    %cst = arith.constant dense<0.000000e+00> : vector<32x96xf32>
    %4 = tpu.matmul %2, %3, %cst {dimension_numbers = #tpu.dot_dimension_numbers<[1], [0], [0], [1], [0, 0, 1, 1], [], []>} : vector<32x32xbf16>, vector<32x96xbf16>, vector<32x96xf32> -> vector<32x96xf32>
    %c0_4 = arith.constant 0 : index
    %c0_5 = arith.constant 0 : index
    %5 = vector.load %arg3[%c0_4, %c0_5] : memref<1x96xf32, #tpu.memory_space<vmem>>, vector<1x96xf32>
    %6 = vector.broadcast %5 : vector<1x96xf32> to vector<32x96xf32>
    %7 = arith.addf %4, %6 : vector<32x96xf32>
    %cst_6 = arith.constant 0.000000e+00 : f32
    %8 = vector.broadcast %cst_6 : f32 to vector<32x32xf32>
    %9 = vector.extract_strided_slice %7 {offsets = [0, 0], sizes = [32, 16], strides = [1, 1]} : vector<32x96xf32> to vector<32x16xf32>
    %10 = vector.extract_strided_slice %7 {offsets = [0, 32], sizes = [32, 16], strides = [1, 1]} : vector<32x96xf32> to vector<32x16xf32>
    %11 = vector.extract_strided_slice %7 {offsets = [0, 64], sizes = [32, 16], strides = [1, 1]} : vector<32x96xf32> to vector<32x16xf32>
    %12 = vector.shape_cast %9 : vector<32x16xf32> to vector<4x8x16xf32>
    %13 = arith.truncf %12 : vector<4x8x16xf32> to vector<4x8x16xbf16>
    %14 = vector.shape_cast %10 : vector<32x16xf32> to vector<4x8x16xf32>
    %15 = arith.truncf %14 : vector<4x8x16xf32> to vector<4x8x16xbf16>
    %16 = vector.shape_cast %11 : vector<32x16xf32> to vector<4x8x16xf32>
    %17 = arith.truncf %16 : vector<4x8x16xf32> to vector<4x8x16xbf16>
    "tpu.trace_start"() <{level = 10 : i32, message = "bqd,bkd->bqk"}> : () -> ()
    %cst_7 = arith.constant dense<0.000000e+00> : vector<4x8x8xf32>
    %18 = tpu.matmul %15, %13, %cst_7 {dimension_numbers = #tpu.dot_dimension_numbers<[2], [2], [1], [1], [0, 0, 0, 1, 1, 1], [0], [0]>} : vector<4x8x16xbf16>, vector<4x8x16xbf16>, vector<4x8x8xf32> -> vector<4x8x8xf32>
    "tpu.trace_stop"() : () -> ()
    %cst_8 = arith.constant dense<0xFF800000> : vector<4x8xf32>
    %19 = vector.multi_reduction <maximumf>, %18, %cst_8 [2] : vector<4x8x8xf32> to vector<4x8xf32>
    %20 = vector.shape_cast %19 : vector<4x8xf32> to vector<4x8x1xf32>
    %21 = vector.broadcast %20 : vector<4x8x1xf32> to vector<4x8x8xf32>
    %22 = arith.subf %18, %21 : vector<4x8x8xf32>
    %23 = math.exp %22 : vector<4x8x8xf32>
    %cst_9 = arith.constant dense<0.000000e+00> : vector<4x8xf32>
    %24 = vector.multi_reduction <add>, %23, %cst_9 [2] : vector<4x8x8xf32> to vector<4x8xf32>
    %25 = vector.shape_cast %24 : vector<4x8xf32> to vector<4x8x1xf32>
    %26 = tpu.reciprocal %25 {approx = true} : vector<4x8x1xf32> -> vector<4x8x1xf32>
    %27 = vector.broadcast %26 : vector<4x8x1xf32> to vector<4x8x8xf32>
    %28 = arith.mulf %23, %27 : vector<4x8x8xf32>
    %29 = arith.truncf %28 : vector<4x8x8xf32> to vector<4x8x8xbf16>
    "tpu.trace_start"() <{level = 10 : i32, message = "bqk,bkd->bqd"}> : () -> ()
    %cst_10 = arith.constant dense<0.000000e+00> : vector<4x8x16xf32>
    %30 = tpu.matmul %29, %17, %cst_10 {dimension_numbers = #tpu.dot_dimension_numbers<[2], [1], [1], [2], [0, 0, 0, 1, 1, 2], [0], [0]>} : vector<4x8x8xbf16>, vector<4x8x16xbf16>, vector<4x8x16xf32> -> vector<4x8x16xf32>
    "tpu.trace_stop"() : () -> ()
    %31 = vector.shape_cast %30 : vector<4x8x16xf32> to vector<32x16xf32>
    %32 = arith.truncf %31 : vector<32x16xf32> to vector<32x16xbf16>
    %c0_11 = arith.constant 0 : index
    %c0_12 = arith.constant 0 : index
    %33 = vector.load %arg4[%c0_11, %c0_12] : memref<32x32xbf16, #tpu.memory_space<vmem>>, vector<16x32xbf16>
    %cst_13 = arith.constant dense<0.000000e+00> : vector<32x32xf32>
    %34 = tpu.matmul %32, %33, %cst_13 {dimension_numbers = #tpu.dot_dimension_numbers<[1], [0], [0], [1], [0, 0, 1, 1], [], []>} : vector<32x16xbf16>, vector<16x32xbf16>, vector<32x32xf32> -> vector<32x32xf32>
    %35 = arith.addf %8, %34 : vector<32x32xf32>
    %36 = vector.extract_strided_slice %7 {offsets = [0, 16], sizes = [32, 16], strides = [1, 1]} : vector<32x96xf32> to vector<32x16xf32>
    %37 = vector.extract_strided_slice %7 {offsets = [0, 48], sizes = [32, 16], strides = [1, 1]} : vector<32x96xf32> to vector<32x16xf32>
    %38 = vector.extract_strided_slice %7 {offsets = [0, 80], sizes = [32, 16], strides = [1, 1]} : vector<32x96xf32> to vector<32x16xf32>
    %39 = vector.shape_cast %36 : vector<32x16xf32> to vector<4x8x16xf32>
    %40 = arith.truncf %39 : vector<4x8x16xf32> to vector<4x8x16xbf16>
    %41 = vector.shape_cast %37 : vector<32x16xf32> to vector<4x8x16xf32>
    %42 = arith.truncf %41 : vector<4x8x16xf32> to vector<4x8x16xbf16>
    %43 = vector.shape_cast %38 : vector<32x16xf32> to vector<4x8x16xf32>
    %44 = arith.truncf %43 : vector<4x8x16xf32> to vector<4x8x16xbf16>
    "tpu.trace_start"() <{level = 10 : i32, message = "bqd,bkd->bqk"}> : () -> ()
    %cst_14 = arith.constant dense<0.000000e+00> : vector<4x8x8xf32>
    %45 = tpu.matmul %42, %40, %cst_14 {dimension_numbers = #tpu.dot_dimension_numbers<[2], [2], [1], [1], [0, 0, 0, 1, 1, 1], [0], [0]>} : vector<4x8x16xbf16>, vector<4x8x16xbf16>, vector<4x8x8xf32> -> vector<4x8x8xf32>
    "tpu.trace_stop"() : () -> ()
    %cst_15 = arith.constant dense<0xFF800000> : vector<4x8xf32>
    %46 = vector.multi_reduction <maximumf>, %45, %cst_15 [2] : vector<4x8x8xf32> to vector<4x8xf32>
    %47 = vector.shape_cast %46 : vector<4x8xf32> to vector<4x8x1xf32>
    %48 = vector.broadcast %47 : vector<4x8x1xf32> to vector<4x8x8xf32>
    %49 = arith.subf %45, %48 : vector<4x8x8xf32>
    %50 = math.exp %49 : vector<4x8x8xf32>
    %cst_16 = arith.constant dense<0.000000e+00> : vector<4x8xf32>
    %51 = vector.multi_reduction <add>, %50, %cst_16 [2] : vector<4x8x8xf32> to vector<4x8xf32>
    %52 = vector.shape_cast %51 : vector<4x8xf32> to vector<4x8x1xf32>
    %53 = tpu.reciprocal %52 {approx = true} : vector<4x8x1xf32> -> vector<4x8x1xf32>
    %54 = vector.broadcast %53 : vector<4x8x1xf32> to vector<4x8x8xf32>
    %55 = arith.mulf %50, %54 : vector<4x8x8xf32>
    %56 = arith.truncf %55 : vector<4x8x8xf32> to vector<4x8x8xbf16>
    "tpu.trace_start"() <{level = 10 : i32, message = "bqk,bkd->bqd"}> : () -> ()
    %cst_17 = arith.constant dense<0.000000e+00> : vector<4x8x16xf32>
    %57 = tpu.matmul %56, %44, %cst_17 {dimension_numbers = #tpu.dot_dimension_numbers<[2], [1], [1], [2], [0, 0, 0, 1, 1, 2], [0], [0]>} : vector<4x8x8xbf16>, vector<4x8x16xbf16>, vector<4x8x16xf32> -> vector<4x8x16xf32>
    "tpu.trace_stop"() : () -> ()
    %58 = vector.shape_cast %57 : vector<4x8x16xf32> to vector<32x16xf32>
    %59 = arith.truncf %58 : vector<32x16xf32> to vector<32x16xbf16>
    %c16 = arith.constant 16 : index
    %c0_18 = arith.constant 0 : index
    %60 = vector.load %arg4[%c16, %c0_18] : memref<32x32xbf16, #tpu.memory_space<vmem>>, vector<16x32xbf16>
    %cst_19 = arith.constant dense<0.000000e+00> : vector<32x32xf32>
    %61 = tpu.matmul %59, %60, %cst_19 {dimension_numbers = #tpu.dot_dimension_numbers<[1], [0], [0], [1], [0, 0, 1, 1], [], []>} : vector<32x16xbf16>, vector<16x32xbf16>, vector<32x32xf32> -> vector<32x32xf32>
    %62 = arith.addf %35, %61 : vector<32x32xf32>
    %c0_20 = arith.constant 0 : index
    %c0_21 = arith.constant 0 : index
    %63 = vector.load %arg5[%c0_20, %c0_21] : memref<1x32xf32, #tpu.memory_space<vmem>>, vector<1x32xf32>
    %64 = vector.broadcast %63 : vector<1x32xf32> to vector<32x32xf32>
    %65 = arith.addf %62, %64 : vector<32x32xf32>
    %66 = vector.shape_cast %65 : vector<32x32xf32> to vector<4x8x32xf32>
    %c0_22 = arith.constant 0 : index
    %c0_23 = arith.constant 0 : index
    %c0_24 = arith.constant 0 : index
    %67 = vector.load %arg6[%c0_22, %c0_23, %c0_24] : memref<4x8x32xf32, #tpu.memory_space<vmem>>, vector<4x8x32xf32>
    tpu.vector_store %arg6[%c0_22, %c0_23, %c0_24], %66 {strides = array<i32>} : memref<4x8x32xf32, #tpu.memory_space<vmem>>, vector<4x8x32xf32>,
    return
  }
  func.func @transform_0(%arg0: i32) -> (i32, i32, i32) {
    %c0_i32 = arith.constant 0 : i32
    %c0_i32_0 = arith.constant 0 : i32
    %c0_i32_1 = arith.constant 0 : i32
    return %arg0, %c0_i32, %c0_i32_0 : i32, i32, i32
  }
  func.func @transform_1(%arg0: i32) -> (i32, i32) {
    %c0_i32 = arith.constant 0 : i32
    %c0_i32_0 = arith.constant 0 : i32
    %c0_i32_1 = arith.constant 0 : i32
    return %c0_i32, %c0_i32_0 : i32, i32
  }
  func.func @transform_2(%arg0: i32) -> (i32, i32) {
    %c0_i32 = arith.constant 0 : i32
    %c0_i32_0 = arith.constant 0 : i32
    %c0_i32_1 = arith.constant 0 : i32
    return %c0_i32, %c0_i32_0 : i32, i32
  }
  func.func @transform_3(%arg0: i32) -> (i32, i32) {
    %c0_i32 = arith.constant 0 : i32
    %c0_i32_0 = arith.constant 0 : i32
    %c0_i32_1 = arith.constant 0 : i32
    return %c0_i32, %c0_i32_0 : i32, i32
  }
  func.func @transform_4(%arg0: i32) -> (i32, i32) {
    %c0_i32 = arith.constant 0 : i32
    %c0_i32_0 = arith.constant 0 : i32
    %c0_i32_1 = arith.constant 0 : i32
    return %c0_i32, %c0_i32_0 : i32, i32
  }
  func.func @transform_5(%arg0: i32) -> (i32, i32, i32) {
    %c0_i32 = arith.constant 0 : i32
    %c0_i32_0 = arith.constant 0 : i32
    %c0_i32_1 = arith.constant 0 : i32
    return %arg0, %c0_i32, %c0_i32_0 : i32, i32, i32
  }
}

</mosaic_0001>

<llo_original>
// kernel: tpu_custom_call.1
$region0: #{tpu_custom_call.1}
  #allocation0 [shape = 'u32[]', space=smem, size = 0x4, offset = 0x4, fixed_abs, tag = 'smem constant byte address 0x4 - core index']
  #allocation1 [shape = 'u32[144,128]{1,0:T(1,128)}', space=vmem, size = 0x12000, scoped, tag = 'internal scratch']
  %s0 = inlined_call_operand.hbm [shape: f32[8,8,32], index: 0, kind: input, shape index: {}]
  %s1 = inlined_call_operand.hbm [shape: bf16[32,96], index: 1, kind: input, shape index: {}]
  %s2 = inlined_call_operand.vmem [shape: f32[1,96], index: 2, kind: input, shape index: {}]
  %s3 = inlined_call_operand.hbm [shape: bf16[32,32], index: 3, kind: input, shape index: {}]
  %s4 = inlined_call_operand.vmem [shape: f32[1,32], index: 4, kind: input, shape index: {}]
  %s5 = inlined_call_operand.hbm [shape: f32[8,8,32], index: 5, kind: output, shape index: {}]
  %s6 = sld [smem:[#allocation0]]
  $region65: #{tpu_custom_call.1} parent=0
    _
  %s8 = ssub.s32 1, %s6
  %s9 = scalar_select 0, %s8, %s6
  $region1: #{tpu_custom_call.1} parent=0
    #allocation2 [shape = 'u8[32768]{0}', space=vmem, size = 0x8000, scoped, tag = 'input window, operand 0']
    #allocation3 [shape = 's32[2]{0}', space=sflag, size = 0x8, scoped, tag = 'scoped memory for tpu_custom_call.1']
    #allocation4 [shape = 's32[2]{0}', space=sflag, size = 0x8, scoped, tag = 'scoped memory for tpu_custom_call.1']
    #allocation5 [shape = 'u8[8192]{0}', space=vmem, size = 0x2000, scoped, tag = 'input window, operand 1, single buffered']
    #allocation6 [shape = 's32[1]{0}', space=sflag, size = 0x4, scoped, tag = 'scoped memory for tpu_custom_call.1']
    #allocation7 [shape = 'u8[8192]{0}', space=vmem, size = 0x2000, scoped, tag = 'input window, operand 3, single buffered']
    #allocation8 [shape = 'u8[32768]{0}', space=vmem, size = 0x8000, scoped, tag = 'output window, operand 0']
    %10 = vsyncpa [#allocation3], 0
    %s11 = scalar_lea.sflag [#allocation3], 1
    %12 = vsyncpa %s11, 0
    %13 = vsyncpa [#allocation6], 0
    %14 = vsyncpa [#allocation4], 0
    %s15 = scalar_lea.sflag [#allocation4], 1
    %16 = vsyncpa %s15, 0
    loop: start=0, step=1, limit=4
    $region2: #{tpu_custom_call.1} parent=1 // loop_pre_header
      _
    $region3: #{tpu_custom_call.1} parent=1 // loop_header
      %s18 = sphi 0, %s22
      %p19 = scmp.ge.s32.totalorder %s18, 4
      %s28 = sphi 0, %s30
      %s31 = sphi 0, %s28
      %s32 = sphi 0, %s31
      %s48 = sphi 0, %s32
      %s52 = sphi 0, %s52
      %s54 = sphi 0, %s52
      %s55 = sphi 0, %s54
      %s69 = sphi 0, %s55
      %s73 = sphi 0, %s73
      %s75 = sphi 0, %s73
      %s76 = sphi 0, %s75
      %s90 = sphi 0, %s76
      %s94 = sphi 0, %s94
      %s96 = sphi 0, %s94
      %s97 = sphi 0, %s96
      %s111 = sphi 0, %s97
      %s115 = sphi 0, %s115
      %s117 = sphi 0, %s115
      %s118 = sphi 0, %s117
      %s132 = sphi 0, %s118
      %s138 = sphi 0, %s140
      %s141 = sphi 0, %s138
      %s142 = sphi 0, %s141
      %s158 = sphi 0, %s142
    $region4: #{tpu_custom_call.1} parent=1 // loop_header_branch
      %21 = sbr.rel (%p19) target = $region8
    $region5: #{tpu_custom_call.1} parent=1 // loop_body
      %s23 = ssub.s32 %s18, 1
      %s24 = ssub.s32 %s18, 2
      %s25 = sadd.s32 %s18, 1
      %s26 = ssub.s32 %s18, %s25
      %p27 = scmp.eq.s32.totalorder %s26, 0
      %s29 = sadd.s32 %s28, 1
      %s30 = scalar_select %p27, %s28, %s29
      %p33 = pneg %p27
      %p34 = scmp.eq.s32.totalorder %s18, 1
      %p35 = por %p33, %p34
      %p36 = scmp.ne.s32.totalorder %s28, %s31
      %p37 = scmp.eq.s32.totalorder %s18, 0
      %p38 = por %p36, %p37
      %p39 = scmp.ne.s32.totalorder %s28, %s31
      %p40 = scmp.eq.s32.totalorder %s23, 1
      %p41 = por %p39, %p40
      %p42 = scmp.ne.s32.totalorder %s31, %s32
      %p43 = scmp.eq.s32.totalorder %s23, 0
      %p44 = por %p42, %p43
      %p45 = scmp.ne.s32.totalorder %s31, %s32
      %p46 = scmp.eq.s32.totalorder %s24, 1
      %p47 = por %p45, %p46
      %p49 = scmp.ne.s32.totalorder %s32, %s48
      %p50 = scmp.eq.s32.totalorder %s24, 0
      %p51 = por %p49, %p50
      %s53 = sadd.s32 %s52, 1
      %p56 = scmp.eq.s32.totalorder %s18, 1
      %p57 = scmp.ne.s32.totalorder %s52, %s54
      %p58 = scmp.eq.s32.totalorder %s18, 0
      %p59 = por %p57, %p58
      %p60 = scmp.ne.s32.totalorder %s52, %s54
      %p61 = scmp.eq.s32.totalorder %s23, 1
      %p62 = por %p60, %p61
      %p63 = scmp.ne.s32.totalorder %s54, %s55
      %p64 = scmp.eq.s32.totalorder %s23, 0
      %p65 = por %p63, %p64
      %p66 = scmp.ne.s32.totalorder %s54, %s55
      %p67 = scmp.eq.s32.totalorder %s24, 1
      %p68 = por %p66, %p67
      %p70 = scmp.ne.s32.totalorder %s55, %s69
      %p71 = scmp.eq.s32.totalorder %s24, 0
      %p72 = por %p70, %p71
      %s74 = sadd.s32 %s73, 1
      %p77 = scmp.eq.s32.totalorder %s18, 1
      %p78 = scmp.ne.s32.totalorder %s73, %s75
      %p79 = scmp.eq.s32.totalorder %s18, 0
      %p80 = por %p78, %p79
      %p81 = scmp.ne.s32.totalorder %s73, %s75
      %p82 = scmp.eq.s32.totalorder %s23, 1
      %p83 = por %p81, %p82
      %p84 = scmp.ne.s32.totalorder %s75, %s76
      %p85 = scmp.eq.s32.totalorder %s23, 0
      %p86 = por %p84, %p85
      %p87 = scmp.ne.s32.totalorder %s75, %s76
      %p88 = scmp.eq.s32.totalorder %s24, 1
      %p89 = por %p87, %p88
      %p91 = scmp.ne.s32.totalorder %s76, %s90
      %p92 = scmp.eq.s32.totalorder %s24, 0
      %p93 = por %p91, %p92
      %s95 = sadd.s32 %s94, 1
      %p98 = scmp.eq.s32.totalorder %s18, 1
      %p99 = scmp.ne.s32.totalorder %s94, %s96
      %p100 = scmp.eq.s32.totalorder %s18, 0
      %p101 = por %p99, %p100
      %p102 = scmp.ne.s32.totalorder %s94, %s96
      %p103 = scmp.eq.s32.totalorder %s23, 1
      %p104 = por %p102, %p103
      %p105 = scmp.ne.s32.totalorder %s96, %s97
      %p106 = scmp.eq.s32.totalorder %s23, 0
      %p107 = por %p105, %p106
      %p108 = scmp.ne.s32.totalorder %s96, %s97
      %p109 = scmp.eq.s32.totalorder %s24, 1
      %p110 = por %p108, %p109
      %p112 = scmp.ne.s32.totalorder %s97, %s111
      %p113 = scmp.eq.s32.totalorder %s24, 0
      %p114 = por %p112, %p113
      %s116 = sadd.s32 %s115, 1
      %p119 = scmp.eq.s32.totalorder %s18, 1
      %p120 = scmp.ne.s32.totalorder %s115, %s117
      %p121 = scmp.eq.s32.totalorder %s18, 0
      %p122 = por %p120, %p121
      %p123 = scmp.ne.s32.totalorder %s115, %s117
      %p124 = scmp.eq.s32.totalorder %s23, 1
      %p125 = por %p123, %p124
      %p126 = scmp.ne.s32.totalorder %s117, %s118
      %p127 = scmp.eq.s32.totalorder %s23, 0
      %p128 = por %p126, %p127
      %p129 = scmp.ne.s32.totalorder %s117, %s118
      %p130 = scmp.eq.s32.totalorder %s24, 1
      %p131 = por %p129, %p130
      %p133 = scmp.ne.s32.totalorder %s118, %s132
      %p134 = scmp.eq.s32.totalorder %s24, 0
      %p135 = por %p133, %p134
      %s136 = ssub.s32 %s18, %s25
      %p137 = scmp.eq.s32.totalorder %s136, 0
      %s139 = sadd.s32 %s138, 1
      %s140 = scalar_select %p137, %s138, %s139
      %p143 = pneg %p137
      %p144 = scmp.eq.s32.totalorder %s18, 1
      %p145 = por %p143, %p144
      %p146 = scmp.ne.s32.totalorder %s138, %s141
      %p147 = scmp.eq.s32.totalorder %s18, 0
      %p148 = por %p146, %p147
      %p149 = scmp.ne.s32.totalorder %s138, %s141
      %p150 = scmp.eq.s32.totalorder %s23, 1
      %p151 = por %p149, %p150
      %p152 = scmp.ne.s32.totalorder %s141, %s142
      %p153 = scmp.eq.s32.totalorder %s23, 0
      %p154 = por %p152, %p153
      %p155 = scmp.ne.s32.totalorder %s141, %s142
      %p156 = scmp.eq.s32.totalorder %s24, 1
      %p157 = por %p155, %p156
      %p159 = scmp.ne.s32.totalorder %s142, %s158
      %p160 = scmp.eq.s32.totalorder %s24, 0
      %p161 = por %p159, %p160
      %p162 = scmp.le.s32.totalorder 1, %s18
      %p163 = scmp.lt.s32.totalorder %s18, 3
      %p164 = pnand %p162, %p163
      %p165 = pneg %p164
      // Predicated region
      $region9: #{tpu_custom_call.1} parent=5 // pred_check
        _
      $region10: #{tpu_custom_call.1} parent=5 // pred_check_branch
        %167 = sbr.rel (%p164) target = $region12
      $region11: #{tpu_custom_call.1} parent=5 // pred_region
        %s168 = ssub.s32 %s18, 1
        // Predicated region
        $region13: #{tpu_custom_call.1} parent=11 // pred_check
          %p169 = pneg %p65
        $region14: #{tpu_custom_call.1} parent=11 // pred_check_branch
          %171 = sbr.rel (%p169) target = $region16
        $region15: #{tpu_custom_call.1} parent=11 // pred_region
          %s173 = ssub.s32 256, 256
          %174 = vsyncadd [#allocation6], %s173
          %s175 = sshll.u32 [#allocation5], 4
          %s176 = int_to_ptr.vmem [resolvable:$true] %s175
          %181 = dma.hbm_to_vmem [thread:$0]  %s1, 256, %s176, [#allocation6], 64, 64, 4
        $region16: #{tpu_custom_call.1} parent=11 // pred_fallthru
          _
        // Predicated region
        $region17: #{tpu_custom_call.1} parent=11 // pred_check
          %p182 = pneg %p86
        $region18: #{tpu_custom_call.1} parent=11 // pred_check_branch
          %184 = sbr.rel (%p182) target = $region20
        $region19: #{tpu_custom_call.1} parent=11 // pred_region
          _
        $region20: #{tpu_custom_call.1} parent=11 // pred_fallthru
          _
        // Predicated region
        $region21: #{tpu_custom_call.1} parent=11 // pred_check
          %p185 = pneg %p107
        $region22: #{tpu_custom_call.1} parent=11 // pred_check_branch
          %187 = sbr.rel (%p185) target = $region24
        $region23: #{tpu_custom_call.1} parent=11 // pred_region
          %s189 = ssub.s32 256, 256
          %190 = vsyncadd [#allocation6], %s189
          %s191 = sshll.u32 [#allocation7], 4
          %s192 = int_to_ptr.vmem [resolvable:$true] %s191
          %197 = dma.hbm_to_vmem [thread:$0]  %s3, 256, %s192, [#allocation6], 64, 64, 4
        $region24: #{tpu_custom_call.1} parent=11 // pred_fallthru
          _
        // Predicated region
        $region25: #{tpu_custom_call.1} parent=11 // pred_check
          %p198 = pneg %p128
        $region26: #{tpu_custom_call.1} parent=11 // pred_check_branch
          %200 = sbr.rel (%p198) target = $region28
        $region27: #{tpu_custom_call.1} parent=11 // pred_region
          _
        $region28: #{tpu_custom_call.1} parent=11 // pred_fallthru
          _
      $region12: #{tpu_custom_call.1} parent=5 // pred_fallthru
        _
      %p201 = scmp.lt.s32.totalorder %s18, 2
      // Predicated region
      $region29: #{tpu_custom_call.1} parent=5 // pred_check
        %p202 = pneg %p201
      $region30: #{tpu_custom_call.1} parent=5 // pred_check_branch
        %204 = sbr.rel (%p202) target = $region32
      $region31: #{tpu_custom_call.1} parent=5 // pred_region
        // Predicated region
        $region33: #{tpu_custom_call.1} parent=31 // pred_check
          %p205 = pneg %p38
        $region34: #{tpu_custom_call.1} parent=31 // pred_check_branch
          %207 = sbr.rel (%p205) target = $region36
        $region35: #{tpu_custom_call.1} parent=31 // pred_region
          %s208 = sand.u32 %s28, 1
          %s209 = scalar_lea.sflag [#allocation3], %s208
          %s210 = sand.u32 %s28, 1
          %s211 = smul.addr %s210, 32
          %s212 = scalar_lea.vmem [#allocation2], %s211
          %s213 = smul.u32 4, %s18
          %s215 = ssub.s32 512, 512
          %216 = vsyncadd %s209, %s215
          %s217 = smul.addr %s213, 128
          %s218 = scalar_lea.hbm %s0, %s217
          %s219 = sshll.u32 %s212, 4
          %s220 = int_to_ptr.vmem [resolvable:$true] %s219
          %225 = dma.hbm_to_vmem [thread:$0]  %s218, 512, %s220, %s209, 128, 128, 8
        $region36: #{tpu_custom_call.1} parent=31 // pred_fallthru
          _
      $region32: #{tpu_custom_call.1} parent=5 // pred_fallthru
        _
      %p226 = scmp.le.s32.totalorder 1, %s18
      %p227 = scmp.lt.s32.totalorder %s18, 3
      %p228 = pnand %p226, %p227
      %p229 = pneg %p228
      // Predicated region
      $region37: #{tpu_custom_call.1} parent=5 // pred_check
        _
      $region38: #{tpu_custom_call.1} parent=5 // pred_check_branch
        %231 = sbr.rel (%p228) target = $region40
      $region39: #{tpu_custom_call.1} parent=5 // pred_region
        %s232 = ssub.s32 %s18, 1
        %s233 = sand.u32 %s31, 1
        %s234 = scalar_lea.sflag [#allocation3], %s233
        %s235 = sand.u32 %s31, 1
        %s236 = smul.addr %s235, 32
        %s237 = scalar_lea.vmem [#allocation2], %s236
        // Predicated region
        $region41: #{tpu_custom_call.1} parent=39 // pred_check
          %p238 = pneg %p44
        $region42: #{tpu_custom_call.1} parent=39 // pred_check_branch
          %240 = sbr.rel (%p238) target = $region44
        $region43: #{tpu_custom_call.1} parent=39 // pred_region
          %241 = dma.done %s234, 512
        $region44: #{tpu_custom_call.1} parent=39 // pred_fallthru
          _
        // Predicated region
        $region45: #{tpu_custom_call.1} parent=39 // pred_check
          %p242 = pneg %p65
        $region46: #{tpu_custom_call.1} parent=39 // pred_check_branch
          %244 = sbr.rel (%p242) target = $region48
        $region47: #{tpu_custom_call.1} parent=39 // pred_region
          %245 = dma.done [#allocation6], 256
        $region48: #{tpu_custom_call.1} parent=39 // pred_fallthru
          _
        // Predicated region
        $region49: #{tpu_custom_call.1} parent=39 // pred_check
          %p246 = pneg %p107
        $region50: #{tpu_custom_call.1} parent=39 // pred_check_branch
          %248 = sbr.rel (%p246) target = $region52
        $region51: #{tpu_custom_call.1} parent=39 // pred_region
          %249 = dma.done [#allocation6], 256
        $region52: #{tpu_custom_call.1} parent=39 // pred_fallthru
          _
        %s250 = sand.u32 %s31, 1
        %s251 = scalar_lea.sflag [#allocation3], %s250
        %s252 = sand.u32 %s31, 1
        %s253 = smul.addr %s252, 32
        %s254 = scalar_lea.vmem [#allocation2], %s253
        %p255 = pneg %p44
        %p256 = pneg %p41
        %p257 = pneg %p65
        %p258 = pneg %p62
        %p259 = pneg %p86
        %p260 = pneg %p83
        %p261 = pneg %p107
        %p262 = pneg %p104
        %p263 = pneg %p128
        %p264 = pneg %p125
        %p265 = pneg %p154
        %p266 = pneg %p151
        %s267 = sand.u32 %s141, 1
        %s268 = scalar_lea.sflag [#allocation4], %s267
        %s269 = sand.u32 %s141, 1
        %s270 = smul.addr %s269, 32
        %s271 = scalar_lea.vmem [#allocation8], %s270
        %s272 = smul.u32 4, %s23
        %s273 = smul.u32 4, %s23
        %v275 = vld [vmem:[%s237] sm:$0xff]
        %v276 = vld [vmem:[%s237 + $0x8] sm:$0xff]
        %v277 = vld [vmem:[%s237 + $0x10] sm:$0xff]
        %v278 = vld [vmem:[%s237 + $0x18] sm:$0xff]
        %v279 = vpack.c.bf16 %v276, %v275
        %v280 = vpack.c.bf16 %v278, %v277
        %v281 = vld [vmem:[#allocation5] sm:$0xf]
        %v282 = vld [vmem:[#allocation5 + $0x4] sm:$0xf]
        %v283 = vld [vmem:[#allocation5 + $0x8] sm:$0xf]
        %v284 = vld [vmem:[#allocation5 + $0xc] sm:$0xf]
        %v285 = vld [vmem:[%s2] sm:$0x1]
        %v287 = vlaneseq
        %v288 = vshrl.u32 %v287, 7
        %v289 = vsub.s32 0, %v288
        %v290 = vrot.slane %v285, %v289
        %v296 = vunpack.c.l.b16 %v281
        %v297 = vunpack.c.l.b16 %v282
        %v298 = vunpack.c.l.b16 %v283
        %v299 = vunpack.c.l.b16 %v284
        %v300 = vpack.c.b16 %v297, %v296
        %v301 = vpack.c.b16 %v299, %v298
        %vm304 = vcmask 261120
        %v306 = vsel %vm304, %v279, 0
        %v309 = vsel %vm304, %v280, 0
        %311 = vmatprep.subr.bf16.mxu0 0
        %312 = vmatpush1.bf16.msra.mxu0 %v300
        %313 = vmatprep.subr.bf16.mxu0 0
        %314 = vmatpush1.bf16.msra.mxu0 %v301
        %315 = vmatprep.subr.bf16.mxu0 0
        %316 = vmatpush1.bf16.msra.mxu0 0
        %317 = vmatprep.subr.bf16.mxu0 0
        %318 = vmatpush1.bf16.msra.mxu0 0
        %319 = vmatprep.subr.bf16.mxu0 0
        %320 = vmatpush1.bf16.msra.mxu0 0
        %321 = vmatprep.subr.bf16.mxu0 0
        %322 = vmatpush1.bf16.msra.mxu0 0
        %323 = vmatprep.subr.bf16.mxu0 0
        %324 = vmatpush1.bf16.msra.mxu0 0
        %325 = vmatprep.subr.bf16.mxu0 0
        %326 = vmatpush1.bf16.msra.mxu0 0
        %327 = vmatprep.subr.bf16.mxu0 0
        %328 = vmatpush1.bf16.msra.mxu0 0
        %329 = vmatprep.subr.bf16.mxu0 0
        %330 = vmatpush1.bf16.msra.mxu0 0
        %331 = vmatprep.subr.bf16.mxu0 0
        %332 = vmatpush1.bf16.msra.mxu0 0
        %333 = vmatprep.subr.bf16.mxu0 0
        %334 = vmatpush1.bf16.msra.mxu0 0
        %335 = vmatprep.subr.bf16.mxu0 0
        %336 = vmatpush1.bf16.msra.mxu0 0
        %337 = vmatprep.subr.bf16.mxu0 0
        %338 = vmatpush1.bf16.msra.mxu0 0
        %339 = vmatprep.subr.bf16.mxu0 0
        %340 = vmatpush1.bf16.msra.mxu0 0
        %341 = vmatprep.subr.bf16.mxu0 0
        %342 = vmatpush1.bf16.msra.mxu0 0
        %343 = vmatprep.mubr.bf16.mxu0 0
        %344 = vmatmul.mubr.bf16.gmra.mrb[0].mxu0 %v306
        %v345 = vpop.f32.mrb[0].mxu0
        %v346 = vadd.f32 %v290, %v345
        %v347 = vpop.f32.mrb[0].mxu0
        %v348 = vpop.f32.mrb[0].mxu0
        %v349 = vadd.f32 %v290, %v348
        %v350 = vpop.f32.mrb[0].mxu0
        %351 = vmatprep.mubr.bf16.mxu0 0
        %352 = vmatmul.mubr.bf16.gmra.mrb[0].mxu0 %v309
        %v353 = vpop.f32.mrb[0].mxu0
        %v354 = vadd.f32 %v290, %v353
        %v355 = vpop.f32.mrb[0].mxu0
        %v356 = vpop.f32.mrb[0].mxu0
        %v357 = vadd.f32 %v290, %v356
        %v358 = vpop.f32.mrb[0].mxu0
        %359 = vdwg.mxu0
        %v360 = vpack.c.bf16 %v346, %v346
        %v361 = vpack.c.bf16 %v349, %v349
        %v362 = vpack.c.bf16 %v354, %v354
        %v363 = vpack.c.bf16 %v357, %v357
        %365 = vrot.lane.b32.xlu0 %v360, 96
        %v366 = vpop.permute.xlu0 %365
        %vm367 = vcmask 130048
        %v369 = vsel %vm367, %v366, 0
        %v372 = vsel %vm367, %v360, 0
        %374 = vmatprep.subr.bf16.mxu0 0
        %375 = vmatpush1.bf16.xpose.msra.mxu0 %v372
        %376 = vmatprep.subr.bf16.mxu0 0
        %377 = vmatpush1.bf16.xpose.msra.mxu0 0
        %378 = vmatprep.subr.bf16.mxu0 0
        %379 = vmatpush1.bf16.xpose.msra.mxu0 0
        %380 = vmatprep.subr.bf16.mxu0 0
        %381 = vmatpush1.bf16.xpose.msra.mxu0 0
        %382 = vmatprep.subr.bf16.mxu0 0
        %383 = vmatpush1.bf16.xpose.msra.mxu0 0
        %384 = vmatprep.subr.bf16.mxu0 0
        %385 = vmatpush1.bf16.xpose.msra.mxu0 0
        %386 = vmatprep.subr.bf16.mxu0 0
        %387 = vmatpush1.bf16.xpose.msra.mxu0 0
        %388 = vmatprep.subr.bf16.mxu0 0
        %389 = vmatpush1.bf16.xpose.msra.mxu0 0
        %390 = vmatprep.subr.bf16.mxu0 0
        %391 = vmatpush1.bf16.xpose.msra.mxu0 0
        %392 = vmatprep.subr.bf16.mxu0 0
        %393 = vmatpush1.bf16.xpose.msra.mxu0 0
        %394 = vmatprep.subr.bf16.mxu0 0
        %395 = vmatpush1.bf16.xpose.msra.mxu0 0
        %396 = vmatprep.subr.bf16.mxu0 0
        %397 = vmatpush1.bf16.xpose.msra.mxu0 0
        %398 = vmatprep.subr.bf16.mxu0 0
        %399 = vmatpush1.bf16.xpose.msra.mxu0 0
        %400 = vmatprep.subr.bf16.mxu0 0
        %401 = vmatpush1.bf16.xpose.msra.mxu0 0
        %402 = vmatprep.subr.bf16.mxu0 0
        %403 = vmatpush1.bf16.xpose.msra.mxu0 0
        %404 = vmatprep.subr.bf16.mxu0 0
        %405 = vmatpush1.bf16.xpose.msra.mxu0 0
        %406 = vmatprep.mubr.bf16.mxu0 0
        %407 = vmatmul.mubr.bf16.gmra.mrb[0].mxu0 %v369
        %v408 = vpop.f32.mrb[0].mxu0
        %v409 = vadd.f32 0.0, %v408
        %v410 = vpop.f32.mrb[0].mxu0
        %v411 = vpop.f32.mrb[0].mxu0
        %v412 = vpop.f32.mrb[0].mxu0
        %413 = vdwg.mxu0
        %415 = vrot.lane.b32.xlu0 %v361, 96
        %v416 = vpop.permute.xlu0 %415
        %v418 = vsel %vm367, %v416, 0
        %v421 = vsel %vm367, %v361, 0
        %423 = vmatprep.subr.bf16.mxu0 0
        %424 = vmatpush1.bf16.xpose.msra.mxu0 %v421
        %425 = vmatprep.subr.bf16.mxu0 0
        %426 = vmatpush1.bf16.xpose.msra.mxu0 0
        %427 = vmatprep.subr.bf16.mxu0 0
        %428 = vmatpush1.bf16.xpose.msra.mxu0 0
        %429 = vmatprep.subr.bf16.mxu0 0
        %430 = vmatpush1.bf16.xpose.msra.mxu0 0
        %431 = vmatprep.subr.bf16.mxu0 0
        %432 = vmatpush1.bf16.xpose.msra.mxu0 0
        %433 = vmatprep.subr.bf16.mxu0 0
        %434 = vmatpush1.bf16.xpose.msra.mxu0 0
        %435 = vmatprep.subr.bf16.mxu0 0
        %436 = vmatpush1.bf16.xpose.msra.mxu0 0
        %437 = vmatprep.subr.bf16.mxu0 0
        %438 = vmatpush1.bf16.xpose.msra.mxu0 0
        %439 = vmatprep.subr.bf16.mxu0 0
        %440 = vmatpush1.bf16.xpose.msra.mxu0 0
        %441 = vmatprep.subr.bf16.mxu0 0
        %442 = vmatpush1.bf16.xpose.msra.mxu0 0
        %443 = vmatprep.subr.bf16.mxu0 0
        %444 = vmatpush1.bf16.xpose.msra.mxu0 0
        %445 = vmatprep.subr.bf16.mxu0 0
        %446 = vmatpush1.bf16.xpose.msra.mxu0 0
        %447 = vmatprep.subr.bf16.mxu0 0
        %448 = vmatpush1.bf16.xpose.msra.mxu0 0
        %449 = vmatprep.subr.bf16.mxu0 0
        %450 = vmatpush1.bf16.xpose.msra.mxu0 0
        %451 = vmatprep.subr.bf16.mxu0 0
        %452 = vmatpush1.bf16.xpose.msra.mxu0 0
        %453 = vmatprep.subr.bf16.mxu0 0
        %454 = vmatpush1.bf16.xpose.msra.mxu0 0
        %455 = vmatprep.mubr.bf16.mxu0 0
        %456 = vmatmul.mubr.bf16.gmra.mrb[0].mxu0 %v418
        %v457 = vpop.f32.mrb[0].mxu0
        %v458 = vadd.f32 0.0, %v457
        %v459 = vpop.f32.mrb[0].mxu0
        %v460 = vpop.f32.mrb[0].mxu0
        %v461 = vpop.f32.mrb[0].mxu0
        %462 = vdwg.mxu0
        %464 = vrot.lane.b32.xlu0 %v362, 96
        %v465 = vpop.permute.xlu0 %464
        %v467 = vsel %vm367, %v465, 0
        %v470 = vsel %vm367, %v362, 0
        %472 = vmatprep.subr.bf16.mxu0 0
        %473 = vmatpush1.bf16.xpose.msra.mxu0 %v470
        %474 = vmatprep.subr.bf16.mxu0 0
        %475 = vmatpush1.bf16.xpose.msra.mxu0 0
        %476 = vmatprep.subr.bf16.mxu0 0
        %477 = vmatpush1.bf16.xpose.msra.mxu0 0
        %478 = vmatprep.subr.bf16.mxu0 0
        %479 = vmatpush1.bf16.xpose.msra.mxu0 0
        %480 = vmatprep.subr.bf16.mxu0 0
        %481 = vmatpush1.bf16.xpose.msra.mxu0 0
        %482 = vmatprep.subr.bf16.mxu0 0
        %483 = vmatpush1.bf16.xpose.msra.mxu0 0
        %484 = vmatprep.subr.bf16.mxu0 0
        %485 = vmatpush1.bf16.xpose.msra.mxu0 0
        %486 = vmatprep.subr.bf16.mxu0 0
        %487 = vmatpush1.bf16.xpose.msra.mxu0 0
        %488 = vmatprep.subr.bf16.mxu0 0
        %489 = vmatpush1.bf16.xpose.msra.mxu0 0
        %490 = vmatprep.subr.bf16.mxu0 0
        %491 = vmatpush1.bf16.xpose.msra.mxu0 0
        %492 = vmatprep.subr.bf16.mxu0 0
        %493 = vmatpush1.bf16.xpose.msra.mxu0 0
        %494 = vmatprep.subr.bf16.mxu0 0
        %495 = vmatpush1.bf16.xpose.msra.mxu0 0
        %496 = vmatprep.subr.bf16.mxu0 0
        %497 = vmatpush1.bf16.xpose.msra.mxu0 0
        %498 = vmatprep.subr.bf16.mxu0 0
        %499 = vmatpush1.bf16.xpose.msra.mxu0 0
        %500 = vmatprep.subr.bf16.mxu0 0
        %501 = vmatpush1.bf16.xpose.msra.mxu0 0
        %502 = vmatprep.subr.bf16.mxu0 0
        %503 = vmatpush1.bf16.xpose.msra.mxu0 0
        %504 = vmatprep.mubr.bf16.mxu0 0
        %505 = vmatmul.mubr.bf16.gmra.mrb[0].mxu0 %v467
        %v506 = vpop.f32.mrb[0].mxu0
        %v507 = vadd.f32 0.0, %v506
        %v508 = vpop.f32.mrb[0].mxu0
        %v509 = vpop.f32.mrb[0].mxu0
        %v510 = vpop.f32.mrb[0].mxu0
        %511 = vdwg.mxu0
        %513 = vrot.lane.b32.xlu0 %v363, 96
        %v514 = vpop.permute.xlu0 %513
        %v516 = vsel %vm367, %v514, 0
        %v519 = vsel %vm367, %v363, 0
        %521 = vmatprep.subr.bf16.mxu0 0
        %522 = vmatpush1.bf16.xpose.msra.mxu0 %v519
        %523 = vmatprep.subr.bf16.mxu0 0
        %524 = vmatpush1.bf16.xpose.msra.mxu0 0
        %525 = vmatprep.subr.bf16.mxu0 0
        %526 = vmatpush1.bf16.xpose.msra.mxu0 0
        %527 = vmatprep.subr.bf16.mxu0 0
        %528 = vmatpush1.bf16.xpose.msra.mxu0 0
        %529 = vmatprep.subr.bf16.mxu0 0
        %530 = vmatpush1.bf16.xpose.msra.mxu0 0
        %531 = vmatprep.subr.bf16.mxu0 0
        %532 = vmatpush1.bf16.xpose.msra.mxu0 0
        %533 = vmatprep.subr.bf16.mxu0 0
        %534 = vmatpush1.bf16.xpose.msra.mxu0 0
        %535 = vmatprep.subr.bf16.mxu0 0
        %536 = vmatpush1.bf16.xpose.msra.mxu0 0
        %537 = vmatprep.subr.bf16.mxu0 0
        %538 = vmatpush1.bf16.xpose.msra.mxu0 0
        %539 = vmatprep.subr.bf16.mxu0 0
        %540 = vmatpush1.bf16.xpose.msra.mxu0 0
        %541 = vmatprep.subr.bf16.mxu0 0
        %542 = vmatpush1.bf16.xpose.msra.mxu0 0
        %543 = vmatprep.subr.bf16.mxu0 0
        %544 = vmatpush1.bf16.xpose.msra.mxu0 0
        %545 = vmatprep.subr.bf16.mxu0 0
        %546 = vmatpush1.bf16.xpose.msra.mxu0 0
        %547 = vmatprep.subr.bf16.mxu0 0
        %548 = vmatpush1.bf16.xpose.msra.mxu0 0
        %549 = vmatprep.subr.bf16.mxu0 0
        %550 = vmatpush1.bf16.xpose.msra.mxu0 0
        %551 = vmatprep.subr.bf16.mxu0 0
        %552 = vmatpush1.bf16.xpose.msra.mxu0 0
        %553 = vmatprep.mubr.bf16.mxu0 0
        %554 = vmatmul.mubr.bf16.gmra.mrb[0].mxu0 %v516
        %v555 = vpop.f32.mrb[0].mxu0
        %v556 = vadd.f32 0.0, %v555
        %v557 = vpop.f32.mrb[0].mxu0
        %v558 = vpop.f32.mrb[0].mxu0
        %v559 = vpop.f32.mrb[0].mxu0
        %560 = vdwg.mxu0
        %vm561 = vcmask 64512
        %v562 = vsel %vm561, %v409, -inf
        %563 = vmax.xlane.f32.xlu0 %v562
        %v564 = vpop.xlane.xlu0 %563
        %v565 = vsel %vm561, %v458, -inf
        %566 = vmax.xlane.f32.xlu0 %v565
        %v567 = vpop.xlane.xlu0 %566
        %v568 = vsel %vm561, %v507, -inf
        %569 = vmax.xlane.f32.xlu0 %v568
        %v570 = vpop.xlane.xlu0 %569
        %v571 = vsel %vm561, %v556, -inf
        %572 = vmax.xlane.f32.xlu0 %v571
        %v573 = vpop.xlane.xlu0 %572
        %v574 = vsub.f32 %v409, %v564
        %v575 = vsub.f32 %v458, %v567
        %v576 = vsub.f32 %v507, %v570
        %v577 = vsub.f32 %v556, %v573
        %v578 = vmul.f32 %v574, 1.442695
        %v579 = vpow.pop %v578
        %v580 = vmul.f32 %v575, 1.442695
        %v581 = vpow.pop %v580
        %v582 = vmul.f32 %v576, 1.442695
        %v583 = vpow.pop %v582
        %v584 = vmul.f32 %v577, 1.442695
        %v585 = vpow.pop %v584
        %v586 = vsel %vm561, %v579, 0.0
        %587 = vadd.xlane.f32.xlu0 %v586
        %v588 = vpop.xlane.xlu0 %587
        %v589 = vsel %vm561, %v581, 0.0
        %590 = vadd.xlane.f32.xlu0 %v589
        %v591 = vpop.xlane.xlu0 %590
        %v592 = vsel %vm561, %v583, 0.0
        %593 = vadd.xlane.f32.xlu0 %v592
        %v594 = vpop.xlane.xlu0 %593
        %v595 = vsel %vm561, %v585, 0.0
        %596 = vadd.xlane.f32.xlu0 %v595
        %v597 = vpop.xlane.xlu0 %596
        %v598 = vrcp.pop %v588
        %v599 = vrcp.pop %v591
        %v600 = vrcp.pop %v594
        %v601 = vrcp.pop %v597
        %v602 = vmul.f32 %v579, %v598
        %v603 = vmul.f32 %v581, %v599
        %v604 = vmul.f32 %v583, %v600
        %v605 = vmul.f32 %v585, %v601
        %v606 = vpack.c.bf16 %v602, %v602
        %v607 = vpack.c.bf16 %v603, %v603
        %v608 = vpack.c.bf16 %v604, %v604
        %v609 = vpack.c.bf16 %v605, %v605
        %610 = vrot.lane.b32.xlu0 %v360, 64
        %v611 = vpop.permute.xlu0 %610
        %v613 = vsel %vm561, %v606, 0
        %vm615 = vcmask 1043456
        %v617 = vsel %vm615, %v611, 0
        %619 = vmatprep.subr.bf16.mxu0 0
        %620 = vmatpush1.bf16.msra.mxu0 %v617
        %621 = vmatprep.subr.bf16.mxu0 0
        %622 = vmatpush1.bf16.msra.mxu0 0
        %623 = vmatprep.subr.bf16.mxu0 0
        %624 = vmatpush1.bf16.msra.mxu0 0
        %625 = vmatprep.subr.bf16.mxu0 0
        %626 = vmatpush1.bf16.msra.mxu0 0
        %627 = vmatprep.subr.bf16.mxu0 0
        %628 = vmatpush1.bf16.msra.mxu0 0
        %629 = vmatprep.subr.bf16.mxu0 0
        %630 = vmatpush1.bf16.msra.mxu0 0
        %631 = vmatprep.subr.bf16.mxu0 0
        %632 = vmatpush1.bf16.msra.mxu0 0
        %633 = vmatprep.subr.bf16.mxu0 0
        %634 = vmatpush1.bf16.msra.mxu0 0
        %635 = vmatprep.subr.bf16.mxu0 0
        %636 = vmatpush1.bf16.msra.mxu0 0
        %637 = vmatprep.subr.bf16.mxu0 0
        %638 = vmatpush1.bf16.msra.mxu0 0
        %639 = vmatprep.subr.bf16.mxu0 0
        %640 = vmatpush1.bf16.msra.mxu0 0
        %641 = vmatprep.subr.bf16.mxu0 0
        %642 = vmatpush1.bf16.msra.mxu0 0
        %643 = vmatprep.subr.bf16.mxu0 0
        %644 = vmatpush1.bf16.msra.mxu0 0
        %645 = vmatprep.subr.bf16.mxu0 0
        %646 = vmatpush1.bf16.msra.mxu0 0
        %647 = vmatprep.subr.bf16.mxu0 0
        %648 = vmatpush1.bf16.msra.mxu0 0
        %649 = vmatprep.subr.bf16.mxu0 0
        %650 = vmatpush1.bf16.msra.mxu0 0
        %651 = vmatprep.mubr.bf16.mxu0 0
        %652 = vmatmul.mubr.bf16.gmra.mrb[0].mxu0 %v613
        %v653 = vpop.f32.mrb[0].mxu0
        %v654 = vadd.f32 0.0, %v653
        %v655 = vpop.f32.mrb[0].mxu0
        %v656 = vpop.f32.mrb[0].mxu0
        %v657 = vpop.f32.mrb[0].mxu0
        %658 = vdwg.mxu0
        %659 = vrot.lane.b32.xlu0 %v361, 64
        %v660 = vpop.permute.xlu0 %659
        %v662 = vsel %vm561, %v607, 0
        %v665 = vsel %vm615, %v660, 0
        %667 = vmatprep.subr.bf16.mxu0 0
        %668 = vmatpush1.bf16.msra.mxu0 %v665
        %669 = vmatprep.subr.bf16.mxu0 0
        %670 = vmatpush1.bf16.msra.mxu0 0
        %671 = vmatprep.subr.bf16.mxu0 0
        %672 = vmatpush1.bf16.msra.mxu0 0
        %673 = vmatprep.subr.bf16.mxu0 0
        %674 = vmatpush1.bf16.msra.mxu0 0
        %675 = vmatprep.subr.bf16.mxu0 0
        %676 = vmatpush1.bf16.msra.mxu0 0
        %677 = vmatprep.subr.bf16.mxu0 0
        %678 = vmatpush1.bf16.msra.mxu0 0
        %679 = vmatprep.subr.bf16.mxu0 0
        %680 = vmatpush1.bf16.msra.mxu0 0
        %681 = vmatprep.subr.bf16.mxu0 0
        %682 = vmatpush1.bf16.msra.mxu0 0
        %683 = vmatprep.subr.bf16.mxu0 0
        %684 = vmatpush1.bf16.msra.mxu0 0
        %685 = vmatprep.subr.bf16.mxu0 0
        %686 = vmatpush1.bf16.msra.mxu0 0
        %687 = vmatprep.subr.bf16.mxu0 0
        %688 = vmatpush1.bf16.msra.mxu0 0
        %689 = vmatprep.subr.bf16.mxu0 0
        %690 = vmatpush1.bf16.msra.mxu0 0
        %691 = vmatprep.subr.bf16.mxu0 0
        %692 = vmatpush1.bf16.msra.mxu0 0
        %693 = vmatprep.subr.bf16.mxu0 0
        %694 = vmatpush1.bf16.msra.mxu0 0
        %695 = vmatprep.subr.bf16.mxu0 0
        %696 = vmatpush1.bf16.msra.mxu0 0
        %697 = vmatprep.subr.bf16.mxu0 0
        %698 = vmatpush1.bf16.msra.mxu0 0
        %699 = vmatprep.mubr.bf16.mxu0 0
        %700 = vmatmul.mubr.bf16.gmra.mrb[0].mxu0 %v662
        %v701 = vpop.f32.mrb[0].mxu0
        %v702 = vadd.f32 0.0, %v701
        %v703 = vpop.f32.mrb[0].mxu0
        %v704 = vpop.f32.mrb[0].mxu0
        %v705 = vpop.f32.mrb[0].mxu0
        %706 = vdwg.mxu0
        %707 = vrot.lane.b32.xlu0 %v362, 64
        %v708 = vpop.permute.xlu0 %707
        %v710 = vsel %vm561, %v608, 0
        %v713 = vsel %vm615, %v708, 0
        %715 = vmatprep.subr.bf16.mxu0 0
        %716 = vmatpush1.bf16.msra.mxu0 %v713
        %717 = vmatprep.subr.bf16.mxu0 0
        %718 = vmatpush1.bf16.msra.mxu0 0
        %719 = vmatprep.subr.bf16.mxu0 0
        %720 = vmatpush1.bf16.msra.mxu0 0
        %721 = vmatprep.subr.bf16.mxu0 0
        %722 = vmatpush1.bf16.msra.mxu0 0
        %723 = vmatprep.subr.bf16.mxu0 0
        %724 = vmatpush1.bf16.msra.mxu0 0
        %725 = vmatprep.subr.bf16.mxu0 0
        %726 = vmatpush1.bf16.msra.mxu0 0
        %727 = vmatprep.subr.bf16.mxu0 0
        %728 = vmatpush1.bf16.msra.mxu0 0
        %729 = vmatprep.subr.bf16.mxu0 0
        %730 = vmatpush1.bf16.msra.mxu0 0
        %731 = vmatprep.subr.bf16.mxu0 0
        %732 = vmatpush1.bf16.msra.mxu0 0
        %733 = vmatprep.subr.bf16.mxu0 0
        %734 = vmatpush1.bf16.msra.mxu0 0
        %735 = vmatprep.subr.bf16.mxu0 0
        %736 = vmatpush1.bf16.msra.mxu0 0
        %737 = vmatprep.subr.bf16.mxu0 0
        %738 = vmatpush1.bf16.msra.mxu0 0
        %739 = vmatprep.subr.bf16.mxu0 0
        %740 = vmatpush1.bf16.msra.mxu0 0
        %741 = vmatprep.subr.bf16.mxu0 0
        %742 = vmatpush1.bf16.msra.mxu0 0
        %743 = vmatprep.subr.bf16.mxu0 0
        %744 = vmatpush1.bf16.msra.mxu0 0
        %745 = vmatprep.subr.bf16.mxu0 0
        %746 = vmatpush1.bf16.msra.mxu0 0
        %747 = vmatprep.mubr.bf16.mxu0 0
        %748 = vmatmul.mubr.bf16.gmra.mrb[0].mxu0 %v710
        %v749 = vpop.f32.mrb[0].mxu0
        %v750 = vadd.f32 0.0, %v749
        %v751 = vpop.f32.mrb[0].mxu0
        %v752 = vpop.f32.mrb[0].mxu0
        %v753 = vpop.f32.mrb[0].mxu0
        %754 = vdwg.mxu0
        %755 = vrot.lane.b32.xlu0 %v363, 64
        %v756 = vpop.permute.xlu0 %755
        %v758 = vsel %vm561, %v609, 0
        %v761 = vsel %vm615, %v756, 0
        %763 = vmatprep.subr.bf16.mxu0 0
        %764 = vmatpush1.bf16.msra.mxu0 %v761
        %765 = vmatprep.subr.bf16.mxu0 0
        %766 = vmatpush1.bf16.msra.mxu0 0
        %767 = vmatprep.subr.bf16.mxu0 0
        %768 = vmatpush1.bf16.msra.mxu0 0
        %769 = vmatprep.subr.bf16.mxu0 0
        %770 = vmatpush1.bf16.msra.mxu0 0
        %771 = vmatprep.subr.bf16.mxu0 0
        %772 = vmatpush1.bf16.msra.mxu0 0
        %773 = vmatprep.subr.bf16.mxu0 0
        %774 = vmatpush1.bf16.msra.mxu0 0
        %775 = vmatprep.subr.bf16.mxu0 0
        %776 = vmatpush1.bf16.msra.mxu0 0
        %777 = vmatprep.subr.bf16.mxu0 0
        %778 = vmatpush1.bf16.msra.mxu0 0
        %779 = vmatprep.subr.bf16.mxu0 0
        %780 = vmatpush1.bf16.msra.mxu0 0
        %781 = vmatprep.subr.bf16.mxu0 0
        %782 = vmatpush1.bf16.msra.mxu0 0
        %783 = vmatprep.subr.bf16.mxu0 0
        %784 = vmatpush1.bf16.msra.mxu0 0
        %785 = vmatprep.subr.bf16.mxu0 0
        %786 = vmatpush1.bf16.msra.mxu0 0
        %787 = vmatprep.subr.bf16.mxu0 0
        %788 = vmatpush1.bf16.msra.mxu0 0
        %789 = vmatprep.subr.bf16.mxu0 0
        %790 = vmatpush1.bf16.msra.mxu0 0
        %791 = vmatprep.subr.bf16.mxu0 0
        %792 = vmatpush1.bf16.msra.mxu0 0
        %793 = vmatprep.subr.bf16.mxu0 0
        %794 = vmatpush1.bf16.msra.mxu0 0
        %795 = vmatprep.mubr.bf16.mxu0 0
        %796 = vmatmul.mubr.bf16.gmra.mrb[0].mxu0 %v758
        %v797 = vpop.f32.mrb[0].mxu0
        %v798 = vadd.f32 0.0, %v797
        %v799 = vpop.f32.mrb[0].mxu0
        %v800 = vpop.f32.mrb[0].mxu0
        %v801 = vpop.f32.mrb[0].mxu0
        %802 = vdwg.mxu0
        %v803 = vpack.c.bf16 %v702, %v654
        %v804 = vpack.c.bf16 %v798, %v750
        %v805 = vld [vmem:[#allocation7] sm:$0xf]
        %v806 = vld [vmem:[#allocation7 + $0x4] sm:$0xf]
        %807 = vrot.lane.b32.xlu0 %v360, 80
        %v808 = vpop.permute.xlu0 %807
        %809 = vrot.lane.b32.xlu0 %v360, 112
        %v810 = vpop.permute.xlu0 %809
        %v812 = vsel %vm367, %v808, 0
        %v815 = vsel %vm367, %v810, 0
        %817 = vmatprep.subr.bf16.mxu0 0
        %818 = vmatpush1.bf16.xpose.msra.mxu0 %v815
        %819 = vmatprep.subr.bf16.mxu0 0
        %820 = vmatpush1.bf16.xpose.msra.mxu0 0
        %821 = vmatprep.subr.bf16.mxu0 0
        %822 = vmatpush1.bf16.xpose.msra.mxu0 0
        %823 = vmatprep.subr.bf16.mxu0 0
        %824 = vmatpush1.bf16.xpose.msra.mxu0 0
        %825 = vmatprep.subr.bf16.mxu0 0
        %826 = vmatpush1.bf16.xpose.msra.mxu0 0
        %827 = vmatprep.subr.bf16.mxu0 0
        %828 = vmatpush1.bf16.xpose.msra.mxu0 0
        %829 = vmatprep.subr.bf16.mxu0 0
        %830 = vmatpush1.bf16.xpose.msra.mxu0 0
        %831 = vmatprep.subr.bf16.mxu0 0
        %832 = vmatpush1.bf16.xpose.msra.mxu0 0
        %833 = vmatprep.subr.bf16.mxu0 0
        %834 = vmatpush1.bf16.xpose.msra.mxu0 0
        %835 = vmatprep.subr.bf16.mxu0 0
        %836 = vmatpush1.bf16.xpose.msra.mxu0 0
        %837 = vmatprep.subr.bf16.mxu0 0
        %838 = vmatpush1.bf16.xpose.msra.mxu0 0
        %839 = vmatprep.subr.bf16.mxu0 0
        %840 = vmatpush1.bf16.xpose.msra.mxu0 0
        %841 = vmatprep.subr.bf16.mxu0 0
        %842 = vmatpush1.bf16.xpose.msra.mxu0 0
        %843 = vmatprep.subr.bf16.mxu0 0
        %844 = vmatpush1.bf16.xpose.msra.mxu0 0
        %845 = vmatprep.subr.bf16.mxu0 0
        %846 = vmatpush1.bf16.xpose.msra.mxu0 0
        %847 = vmatprep.subr.bf16.mxu0 0
        %848 = vmatpush1.bf16.xpose.msra.mxu0 0
        %849 = vmatprep.mubr.bf16.mxu0 0
        %850 = vmatmul.mubr.bf16.gmra.mrb[0].mxu0 %v812
        %v851 = vpop.f32.mrb[0].mxu0
        %v852 = vadd.f32 0.0, %v851
        %v853 = vpop.f32.mrb[0].mxu0
        %v854 = vpop.f32.mrb[0].mxu0
        %v855 = vpop.f32.mrb[0].mxu0
        %856 = vdwg.mxu0
        %857 = vrot.lane.b32.xlu0 %v361, 80
        %v858 = vpop.permute.xlu0 %857
        %859 = vrot.lane.b32.xlu0 %v361, 112
        %v860 = vpop.permute.xlu0 %859
        %v862 = vsel %vm367, %v858, 0
        %v865 = vsel %vm367, %v860, 0
        %867 = vmatprep.subr.bf16.mxu0 0
        %868 = vmatpush1.bf16.xpose.msra.mxu0 %v865
        %869 = vmatprep.subr.bf16.mxu0 0
        %870 = vmatpush1.bf16.xpose.msra.mxu0 0
        %871 = vmatprep.subr.bf16.mxu0 0
        %872 = vmatpush1.bf16.xpose.msra.mxu0 0
        %873 = vmatprep.subr.bf16.mxu0 0
        %874 = vmatpush1.bf16.xpose.msra.mxu0 0
        %875 = vmatprep.subr.bf16.mxu0 0
        %876 = vmatpush1.bf16.xpose.msra.mxu0 0
        %877 = vmatprep.subr.bf16.mxu0 0
        %878 = vmatpush1.bf16.xpose.msra.mxu0 0
        %879 = vmatprep.subr.bf16.mxu0 0
        %880 = vmatpush1.bf16.xpose.msra.mxu0 0
        %881 = vmatprep.subr.bf16.mxu0 0
        %882 = vmatpush1.bf16.xpose.msra.mxu0 0
        %883 = vmatprep.subr.bf16.mxu0 0
        %884 = vmatpush1.bf16.xpose.msra.mxu0 0
        %885 = vmatprep.subr.bf16.mxu0 0
        %886 = vmatpush1.bf16.xpose.msra.mxu0 0
        %887 = vmatprep.subr.bf16.mxu0 0
        %888 = vmatpush1.bf16.xpose.msra.mxu0 0
        %889 = vmatprep.subr.bf16.mxu0 0
        %890 = vmatpush1.bf16.xpose.msra.mxu0 0
        %891 = vmatprep.subr.bf16.mxu0 0
        %892 = vmatpush1.bf16.xpose.msra.mxu0 0
        %893 = vmatprep.subr.bf16.mxu0 0
        %894 = vmatpush1.bf16.xpose.msra.mxu0 0
        %895 = vmatprep.subr.bf16.mxu0 0
        %896 = vmatpush1.bf16.xpose.msra.mxu0 0
        %897 = vmatprep.subr.bf16.mxu0 0
        %898 = vmatpush1.bf16.xpose.msra.mxu0 0
        %899 = vmatprep.mubr.bf16.mxu0 0
        %900 = vmatmul.mubr.bf16.gmra.mrb[0].mxu0 %v862
        %v901 = vpop.f32.mrb[0].mxu0
        %v902 = vadd.f32 0.0, %v901
        %v903 = vpop.f32.mrb[0].mxu0
        %v904 = vpop.f32.mrb[0].mxu0
        %v905 = vpop.f32.mrb[0].mxu0
        %906 = vdwg.mxu0
        %907 = vrot.lane.b32.xlu0 %v362, 80
        %v908 = vpop.permute.xlu0 %907
        %909 = vrot.lane.b32.xlu0 %v362, 112
        %v910 = vpop.permute.xlu0 %909
        %v912 = vsel %vm367, %v908, 0
        %v915 = vsel %vm367, %v910, 0
        %917 = vmatprep.subr.bf16.mxu0 0
        %918 = vmatpush1.bf16.xpose.msra.mxu0 %v915
        %919 = vmatprep.subr.bf16.mxu0 0
        %920 = vmatpush1.bf16.xpose.msra.mxu0 0
        %921 = vmatprep.subr.bf16.mxu0 0
        %922 = vmatpush1.bf16.xpose.msra.mxu0 0
        %923 = vmatprep.subr.bf16.mxu0 0
        %924 = vmatpush1.bf16.xpose.msra.mxu0 0
        %925 = vmatprep.subr.bf16.mxu0 0
        %926 = vmatpush1.bf16.xpose.msra.mxu0 0
        %927 = vmatprep.subr.bf16.mxu0 0
        %928 = vmatpush1.bf16.xpose.msra.mxu0 0
        %929 = vmatprep.subr.bf16.mxu0 0
        %930 = vmatpush1.bf16.xpose.msra.mxu0 0
        %931 = vmatprep.subr.bf16.mxu0 0
        %932 = vmatpush1.bf16.xpose.msra.mxu0 0
        %933 = vmatprep.subr.bf16.mxu0 0
        %934 = vmatpush1.bf16.xpose.msra.mxu0 0
        %935 = vmatprep.subr.bf16.mxu0 0
        %936 = vmatpush1.bf16.xpose.msra.mxu0 0
        %937 = vmatprep.subr.bf16.mxu0 0
        %938 = vmatpush1.bf16.xpose.msra.mxu0 0
        %939 = vmatprep.subr.bf16.mxu0 0
        %940 = vmatpush1.bf16.xpose.msra.mxu0 0
        %941 = vmatprep.subr.bf16.mxu0 0
        %942 = vmatpush1.bf16.xpose.msra.mxu0 0
        %943 = vmatprep.subr.bf16.mxu0 0
        %944 = vmatpush1.bf16.xpose.msra.mxu0 0
        %945 = vmatprep.subr.bf16.mxu0 0
        %946 = vmatpush1.bf16.xpose.msra.mxu0 0
        %947 = vmatprep.subr.bf16.mxu0 0
        %948 = vmatpush1.bf16.xpose.msra.mxu0 0
        %949 = vmatprep.mubr.bf16.mxu0 0
        %950 = vmatmul.mubr.bf16.gmra.mrb[0].mxu0 %v912
        %v951 = vpop.f32.mrb[0].mxu0
        %v952 = vadd.f32 0.0, %v951
        %v953 = vpop.f32.mrb[0].mxu0
        %v954 = vpop.f32.mrb[0].mxu0
        %v955 = vpop.f32.mrb[0].mxu0
        %956 = vdwg.mxu0
        %957 = vrot.lane.b32.xlu0 %v363, 80
        %v958 = vpop.permute.xlu0 %957
        %959 = vrot.lane.b32.xlu0 %v363, 112
        %v960 = vpop.permute.xlu0 %959
        %v962 = vsel %vm367, %v958, 0
        %v965 = vsel %vm367, %v960, 0
        %967 = vmatprep.subr.bf16.mxu0 0
        %968 = vmatpush1.bf16.xpose.msra.mxu0 %v965
        %969 = vmatprep.subr.bf16.mxu0 0
        %970 = vmatpush1.bf16.xpose.msra.mxu0 0
        %971 = vmatprep.subr.bf16.mxu0 0
        %972 = vmatpush1.bf16.xpose.msra.mxu0 0
        %973 = vmatprep.subr.bf16.mxu0 0
        %974 = vmatpush1.bf16.xpose.msra.mxu0 0
        %975 = vmatprep.subr.bf16.mxu0 0
        %976 = vmatpush1.bf16.xpose.msra.mxu0 0
        %977 = vmatprep.subr.bf16.mxu0 0
        %978 = vmatpush1.bf16.xpose.msra.mxu0 0
        %979 = vmatprep.subr.bf16.mxu0 0
        %980 = vmatpush1.bf16.xpose.msra.mxu0 0
        %981 = vmatprep.subr.bf16.mxu0 0
        %982 = vmatpush1.bf16.xpose.msra.mxu0 0
        %983 = vmatprep.subr.bf16.mxu0 0
        %984 = vmatpush1.bf16.xpose.msra.mxu0 0
        %985 = vmatprep.subr.bf16.mxu0 0
        %986 = vmatpush1.bf16.xpose.msra.mxu0 0
        %987 = vmatprep.subr.bf16.mxu0 0
        %988 = vmatpush1.bf16.xpose.msra.mxu0 0
        %989 = vmatprep.subr.bf16.mxu0 0
        %990 = vmatpush1.bf16.xpose.msra.mxu0 0
        %991 = vmatprep.subr.bf16.mxu0 0
        %992 = vmatpush1.bf16.xpose.msra.mxu0 0
        %993 = vmatprep.subr.bf16.mxu0 0
        %994 = vmatpush1.bf16.xpose.msra.mxu0 0
        %995 = vmatprep.subr.bf16.mxu0 0
        %996 = vmatpush1.bf16.xpose.msra.mxu0 0
        %997 = vmatprep.subr.bf16.mxu0 0
        %998 = vmatpush1.bf16.xpose.msra.mxu0 0
        %999 = vmatprep.mubr.bf16.mxu0 0
        %1000 = vmatmul.mubr.bf16.gmra.mrb[0].mxu0 %v962
        %v1001 = vpop.f32.mrb[0].mxu0
        %v1002 = vadd.f32 0.0, %v1001
        %v1003 = vpop.f32.mrb[0].mxu0
        %v1004 = vpop.f32.mrb[0].mxu0
        %v1005 = vpop.f32.mrb[0].mxu0
        %1006 = vdwg.mxu0
        %v1007 = vsel %vm561, %v852, -inf
        %1008 = vmax.xlane.f32.xlu0 %v1007
        %v1009 = vpop.xlane.xlu0 %1008
        %v1010 = vsel %vm561, %v902, -inf
        %1011 = vmax.xlane.f32.xlu0 %v1010
        %v1012 = vpop.xlane.xlu0 %1011
        %v1013 = vsel %vm561, %v952, -inf
        %1014 = vmax.xlane.f32.xlu0 %v1013
        %v1015 = vpop.xlane.xlu0 %1014
        %v1016 = vsel %vm561, %v1002, -inf
        %1017 = vmax.xlane.f32.xlu0 %v1016
        %v1018 = vpop.xlane.xlu0 %1017
        %v1019 = vsub.f32 %v852, %v1009
        %v1020 = vsub.f32 %v902, %v1012
        %v1021 = vsub.f32 %v952, %v1015
        %v1022 = vsub.f32 %v1002, %v1018
        %v1023 = vmul.f32 %v1019, 1.442695
        %v1024 = vpow.pop %v1023
        %v1025 = vmul.f32 %v1020, 1.442695
        %v1026 = vpow.pop %v1025
        %v1027 = vmul.f32 %v1021, 1.442695
        %v1028 = vpow.pop %v1027
        %v1029 = vmul.f32 %v1022, 1.442695
        %v1030 = vpow.pop %v1029
        %v1031 = vsel %vm561, %v1024, 0.0
        %1032 = vadd.xlane.f32.xlu0 %v1031
        %v1033 = vpop.xlane.xlu0 %1032
        %v1034 = vsel %vm561, %v1026, 0.0
        %1035 = vadd.xlane.f32.xlu0 %v1034
        %v1036 = vpop.xlane.xlu0 %1035
        %v1037 = vsel %vm561, %v1028, 0.0
        %1038 = vadd.xlane.f32.xlu0 %v1037
        %v1039 = vpop.xlane.xlu0 %1038
        %v1040 = vsel %vm561, %v1030, 0.0
        %1041 = vadd.xlane.f32.xlu0 %v1040
        %v1042 = vpop.xlane.xlu0 %1041
        %v1043 = vrcp.pop %v1033
        %v1044 = vrcp.pop %v1036
        %v1045 = vrcp.pop %v1039
        %v1046 = vrcp.pop %v1042
        %v1047 = vmul.f32 %v1024, %v1043
        %v1048 = vmul.f32 %v1026, %v1044
        %v1049 = vmul.f32 %v1028, %v1045
        %v1050 = vmul.f32 %v1030, %v1046
        %v1051 = vpack.c.bf16 %v1047, %v1047
        %v1052 = vpack.c.bf16 %v1048, %v1048
        %v1053 = vpack.c.bf16 %v1049, %v1049
        %v1054 = vpack.c.bf16 %v1050, %v1050
        %1055 = vrot.lane.b32.xlu0 %v360, 48
        %v1056 = vpop.permute.xlu0 %1055
        %v1058 = vsel %vm561, %v1051, 0
        %v1061 = vsel %vm615, %v1056, 0
        %1063 = vmatprep.subr.bf16.mxu0 0
        %1064 = vmatpush1.bf16.msra.mxu0 %v1061
        %1065 = vmatprep.subr.bf16.mxu0 0
        %1066 = vmatpush1.bf16.msra.mxu0 0
        %1067 = vmatprep.subr.bf16.mxu0 0
        %1068 = vmatpush1.bf16.msra.mxu0 0
        %1069 = vmatprep.subr.bf16.mxu0 0
        %1070 = vmatpush1.bf16.msra.mxu0 0
        %1071 = vmatprep.subr.bf16.mxu0 0
        %1072 = vmatpush1.bf16.msra.mxu0 0
        %1073 = vmatprep.subr.bf16.mxu0 0
        %1074 = vmatpush1.bf16.msra.mxu0 0
        %1075 = vmatprep.subr.bf16.mxu0 0
        %1076 = vmatpush1.bf16.msra.mxu0 0
        %1077 = vmatprep.subr.bf16.mxu0 0
        %1078 = vmatpush1.bf16.msra.mxu0 0
        %1079 = vmatprep.subr.bf16.mxu0 0
        %1080 = vmatpush1.bf16.msra.mxu0 0
        %1081 = vmatprep.subr.bf16.mxu0 0
        %1082 = vmatpush1.bf16.msra.mxu0 0
        %1083 = vmatprep.subr.bf16.mxu0 0
        %1084 = vmatpush1.bf16.msra.mxu0 0
        %1085 = vmatprep.subr.bf16.mxu0 0
        %1086 = vmatpush1.bf16.msra.mxu0 0
        %1087 = vmatprep.subr.bf16.mxu0 0
        %1088 = vmatpush1.bf16.msra.mxu0 0
        %1089 = vmatprep.subr.bf16.mxu0 0
        %1090 = vmatpush1.bf16.msra.mxu0 0
        %1091 = vmatprep.subr.bf16.mxu0 0
        %1092 = vmatpush1.bf16.msra.mxu0 0
        %1093 = vmatprep.subr.bf16.mxu0 0
        %1094 = vmatpush1.bf16.msra.mxu0 0
        %1095 = vmatprep.mubr.bf16.mxu0 0
        %1096 = vmatmul.mubr.bf16.gmra.mrb[0].mxu0 %v1058
        %v1097 = vpop.f32.mrb[0].mxu0
        %v1098 = vadd.f32 0.0, %v1097
        %v1099 = vpop.f32.mrb[0].mxu0
        %v1100 = vpop.f32.mrb[0].mxu0
        %v1101 = vpop.f32.mrb[0].mxu0
        %1102 = vdwg.mxu0
        %1103 = vrot.lane.b32.xlu0 %v361, 48
        %v1104 = vpop.permute.xlu0 %1103
        %v1106 = vsel %vm561, %v1052, 0
        %v1109 = vsel %vm615, %v1104, 0
        %1111 = vmatprep.subr.bf16.mxu0 0
        %1112 = vmatpush1.bf16.msra.mxu0 %v1109
        %1113 = vmatprep.subr.bf16.mxu0 0
        %1114 = vmatpush1.bf16.msra.mxu0 0
        %1115 = vmatprep.subr.bf16.mxu0 0
        %1116 = vmatpush1.bf16.msra.mxu0 0
        %1117 = vmatprep.subr.bf16.mxu0 0
        %1118 = vmatpush1.bf16.msra.mxu0 0
        %1119 = vmatprep.subr.bf16.mxu0 0
        %1120 = vmatpush1.bf16.msra.mxu0 0
        %1121 = vmatprep.subr.bf16.mxu0 0
        %1122 = vmatpush1.bf16.msra.mxu0 0
        %1123 = vmatprep.subr.bf16.mxu0 0
        %1124 = vmatpush1.bf16.msra.mxu0 0
        %1125 = vmatprep.subr.bf16.mxu0 0
        %1126 = vmatpush1.bf16.msra.mxu0 0
        %1127 = vmatprep.subr.bf16.mxu0 0
        %1128 = vmatpush1.bf16.msra.mxu0 0
        %1129 = vmatprep.subr.bf16.mxu0 0
        %1130 = vmatpush1.bf16.msra.mxu0 0
        %1131 = vmatprep.subr.bf16.mxu0 0
        %1132 = vmatpush1.bf16.msra.mxu0 0
        %1133 = vmatprep.subr.bf16.mxu0 0
        %1134 = vmatpush1.bf16.msra.mxu0 0
        %1135 = vmatprep.subr.bf16.mxu0 0
        %1136 = vmatpush1.bf16.msra.mxu0 0
        %1137 = vmatprep.subr.bf16.mxu0 0
        %1138 = vmatpush1.bf16.msra.mxu0 0
        %1139 = vmatprep.subr.bf16.mxu0 0
        %1140 = vmatpush1.bf16.msra.mxu0 0
        %1141 = vmatprep.subr.bf16.mxu0 0
        %1142 = vmatpush1.bf16.msra.mxu0 0
        %1143 = vmatprep.mubr.bf16.mxu0 0
        %1144 = vmatmul.mubr.bf16.gmra.mrb[0].mxu0 %v1106
        %v1145 = vpop.f32.mrb[0].mxu0
        %v1146 = vadd.f32 0.0, %v1145
        %v1147 = vpop.f32.mrb[0].mxu0
        %v1148 = vpop.f32.mrb[0].mxu0
        %v1149 = vpop.f32.mrb[0].mxu0
        %1150 = vdwg.mxu0
        %1151 = vrot.lane.b32.xlu0 %v362, 48
        %v1152 = vpop.permute.xlu0 %1151
        %v1154 = vsel %vm561, %v1053, 0
        %v1157 = vsel %vm615, %v1152, 0
        %1159 = vmatprep.subr.bf16.mxu0 0
        %1160 = vmatpush1.bf16.msra.mxu0 %v1157
        %1161 = vmatprep.subr.bf16.mxu0 0
        %1162 = vmatpush1.bf16.msra.mxu0 0
        %1163 = vmatprep.subr.bf16.mxu0 0
        %1164 = vmatpush1.bf16.msra.mxu0 0
        %1165 = vmatprep.subr.bf16.mxu0 0
        %1166 = vmatpush1.bf16.msra.mxu0 0
        %1167 = vmatprep.subr.bf16.mxu0 0
        %1168 = vmatpush1.bf16.msra.mxu0 0
        %1169 = vmatprep.subr.bf16.mxu0 0
        %1170 = vmatpush1.bf16.msra.mxu0 0
        %1171 = vmatprep.subr.bf16.mxu0 0
        %1172 = vmatpush1.bf16.msra.mxu0 0
        %1173 = vmatprep.subr.bf16.mxu0 0
        %1174 = vmatpush1.bf16.msra.mxu0 0
        %1175 = vmatprep.subr.bf16.mxu0 0
        %1176 = vmatpush1.bf16.msra.mxu0 0
        %1177 = vmatprep.subr.bf16.mxu0 0
        %1178 = vmatpush1.bf16.msra.mxu0 0
        %1179 = vmatprep.subr.bf16.mxu0 0
        %1180 = vmatpush1.bf16.msra.mxu0 0
        %1181 = vmatprep.subr.bf16.mxu0 0
        %1182 = vmatpush1.bf16.msra.mxu0 0
        %1183 = vmatprep.subr.bf16.mxu0 0
        %1184 = vmatpush1.bf16.msra.mxu0 0
        %1185 = vmatprep.subr.bf16.mxu0 0
        %1186 = vmatpush1.bf16.msra.mxu0 0
        %1187 = vmatprep.subr.bf16.mxu0 0
        %1188 = vmatpush1.bf16.msra.mxu0 0
        %1189 = vmatprep.subr.bf16.mxu0 0
        %1190 = vmatpush1.bf16.msra.mxu0 0
        %1191 = vmatprep.mubr.bf16.mxu0 0
        %1192 = vmatmul.mubr.bf16.gmra.mrb[0].mxu0 %v1154
        %v1193 = vpop.f32.mrb[0].mxu0
        %v1194 = vadd.f32 0.0, %v1193
        %v1195 = vpop.f32.mrb[0].mxu0
        %v1196 = vpop.f32.mrb[0].mxu0
        %v1197 = vpop.f32.mrb[0].mxu0
        %1198 = vdwg.mxu0
        %1199 = vrot.lane.b32.xlu0 %v363, 48
        %v1200 = vpop.permute.xlu0 %1199
        %v1202 = vsel %vm561, %v1054, 0
        %v1205 = vsel %vm615, %v1200, 0
        %1207 = vmatprep.subr.bf16.mxu0 0
        %1208 = vmatpush1.bf16.msra.mxu0 %v1205
        %1209 = vmatprep.subr.bf16.mxu0 0
        %1210 = vmatpush1.bf16.msra.mxu0 0
        %1211 = vmatprep.subr.bf16.mxu0 0
        %1212 = vmatpush1.bf16.msra.mxu0 0
        %1213 = vmatprep.subr.bf16.mxu0 0
        %1214 = vmatpush1.bf16.msra.mxu0 0
        %1215 = vmatprep.subr.bf16.mxu0 0
        %1216 = vmatpush1.bf16.msra.mxu0 0
        %1217 = vmatprep.subr.bf16.mxu0 0
        %1218 = vmatpush1.bf16.msra.mxu0 0
        %1219 = vmatprep.subr.bf16.mxu0 0
        %1220 = vmatpush1.bf16.msra.mxu0 0
        %1221 = vmatprep.subr.bf16.mxu0 0
        %1222 = vmatpush1.bf16.msra.mxu0 0
        %1223 = vmatprep.subr.bf16.mxu0 0
        %1224 = vmatpush1.bf16.msra.mxu0 0
        %1225 = vmatprep.subr.bf16.mxu0 0
        %1226 = vmatpush1.bf16.msra.mxu0 0
        %1227 = vmatprep.subr.bf16.mxu0 0
        %1228 = vmatpush1.bf16.msra.mxu0 0
        %1229 = vmatprep.subr.bf16.mxu0 0
        %1230 = vmatpush1.bf16.msra.mxu0 0
        %1231 = vmatprep.subr.bf16.mxu0 0
        %1232 = vmatpush1.bf16.msra.mxu0 0
        %1233 = vmatprep.subr.bf16.mxu0 0
        %1234 = vmatpush1.bf16.msra.mxu0 0
        %1235 = vmatprep.subr.bf16.mxu0 0
        %1236 = vmatpush1.bf16.msra.mxu0 0
        %1237 = vmatprep.subr.bf16.mxu0 0
        %1238 = vmatpush1.bf16.msra.mxu0 0
        %1239 = vmatprep.mubr.bf16.mxu0 0
        %1240 = vmatmul.mubr.bf16.gmra.mrb[0].mxu0 %v1202
        %v1241 = vpop.f32.mrb[0].mxu0
        %v1242 = vadd.f32 0.0, %v1241
        %v1243 = vpop.f32.mrb[0].mxu0
        %v1244 = vpop.f32.mrb[0].mxu0
        %v1245 = vpop.f32.mrb[0].mxu0
        %1246 = vdwg.mxu0
        %v1247 = vpack.c.bf16 %v1146, %v1098
        %v1248 = vpack.c.bf16 %v1242, %v1194
        %v1249 = vld [vmem:[#allocation7 + $0x8] sm:$0xf]
        %v1250 = vld [vmem:[#allocation7 + $0xc] sm:$0xf]
        %v1253 = vunpack.c.l.b16 %v1249
        %v1254 = vunpack.c.l.b16 %v1250
        %v1255 = vpack.c.b16 %v1254, %v1253
        %v1258 = vsel %vm367, %v1247, 0
        %v1261 = vsel %vm367, %v1248, 0
        %1263 = vmatprep.subr.bf16.mxu0 0
        %1264 = vmatpush1.bf16.msra.mxu0 %v1255
        %1265 = vmatprep.subr.bf16.mxu0 0
        %1266 = vmatpush1.bf16.msra.mxu0 0
        %1267 = vmatprep.subr.bf16.mxu0 0
        %1268 = vmatpush1.bf16.msra.mxu0 0
        %1269 = vmatprep.subr.bf16.mxu0 0
        %1270 = vmatpush1.bf16.msra.mxu0 0
        %1271 = vmatprep.subr.bf16.mxu0 0
        %1272 = vmatpush1.bf16.msra.mxu0 0
        %1273 = vmatprep.subr.bf16.mxu0 0
        %1274 = vmatpush1.bf16.msra.mxu0 0
        %1275 = vmatprep.subr.bf16.mxu0 0
        %1276 = vmatpush1.bf16.msra.mxu0 0
        %1277 = vmatprep.subr.bf16.mxu0 0
        %1278 = vmatpush1.bf16.msra.mxu0 0
        %1279 = vmatprep.subr.bf16.mxu0 0
        %1280 = vmatpush1.bf16.msra.mxu0 0
        %1281 = vmatprep.subr.bf16.mxu0 0
        %1282 = vmatpush1.bf16.msra.mxu0 0
        %1283 = vmatprep.subr.bf16.mxu0 0
        %1284 = vmatpush1.bf16.msra.mxu0 0
        %1285 = vmatprep.subr.bf16.mxu0 0
        %1286 = vmatpush1.bf16.msra.mxu0 0
        %1287 = vmatprep.subr.bf16.mxu0 0
        %1288 = vmatpush1.bf16.msra.mxu0 0
        %1289 = vmatprep.subr.bf16.mxu0 0
        %1290 = vmatpush1.bf16.msra.mxu0 0
        %1291 = vmatprep.subr.bf16.mxu0 0
        %1292 = vmatpush1.bf16.msra.mxu0 0
        %1293 = vmatprep.subr.bf16.mxu0 0
        %1294 = vmatpush1.bf16.msra.mxu0 0
        %1295 = vmatprep.mubr.bf16.mxu0 0
        %1296 = vmatmul.mubr.bf16.gmra.mrb[0].mxu0 %v1258
        %v1297 = vpop.f32.mrb[0].mxu0
        %v1298 = vadd.f32 0.0, %v1297
        %v1299 = vpop.f32.mrb[0].mxu0
        %v1300 = vpop.f32.mrb[0].mxu0
        %v1301 = vadd.f32 0.0, %v1300
        %v1302 = vpop.f32.mrb[0].mxu0
        %1303 = vmatprep.mubr.bf16.mxu0 0
        %1304 = vmatmul.mubr.bf16.gmra.mrb[0].mxu0 %v1261
        %v1305 = vpop.f32.mrb[0].mxu0
        %v1306 = vadd.f32 0.0, %v1305
        %v1307 = vpop.f32.mrb[0].mxu0
        %v1308 = vpop.f32.mrb[0].mxu0
        %v1309 = vadd.f32 0.0, %v1308
        %v1310 = vpop.f32.mrb[0].mxu0
        %1311 = vdwg.mxu0
        %v1314 = vunpack.c.l.b16 %v805
        %v1315 = vunpack.c.l.b16 %v806
        %v1316 = vpack.c.b16 %v1315, %v1314
        %v1319 = vsel %vm367, %v803, 0
        %v1322 = vsel %vm367, %v804, 0
        %1324 = vmatprep.subr.bf16.mxu0 0
        %1325 = vmatpush1.bf16.msra.mxu0 %v1316
        %1326 = vmatprep.subr.bf16.mxu0 0
        %1327 = vmatpush1.bf16.msra.mxu0 0
        %1328 = vmatprep.subr.bf16.mxu0 0
        %1329 = vmatpush1.bf16.msra.mxu0 0
        %1330 = vmatprep.subr.bf16.mxu0 0
        %1331 = vmatpush1.bf16.msra.mxu0 0
        %1332 = vmatprep.subr.bf16.mxu0 0
        %1333 = vmatpush1.bf16.msra.mxu0 0
        %1334 = vmatprep.subr.bf16.mxu0 0
        %1335 = vmatpush1.bf16.msra.mxu0 0
        %1336 = vmatprep.subr.bf16.mxu0 0
        %1337 = vmatpush1.bf16.msra.mxu0 0
        %1338 = vmatprep.subr.bf16.mxu0 0
        %1339 = vmatpush1.bf16.msra.mxu0 0
        %1340 = vmatprep.subr.bf16.mxu0 0
        %1341 = vmatpush1.bf16.msra.mxu0 0
        %1342 = vmatprep.subr.bf16.mxu0 0
        %1343 = vmatpush1.bf16.msra.mxu0 0
        %1344 = vmatprep.subr.bf16.mxu0 0
        %1345 = vmatpush1.bf16.msra.mxu0 0
        %1346 = vmatprep.subr.bf16.mxu0 0
        %1347 = vmatpush1.bf16.msra.mxu0 0
        %1348 = vmatprep.subr.bf16.mxu0 0
        %1349 = vmatpush1.bf16.msra.mxu0 0
        %1350 = vmatprep.subr.bf16.mxu0 0
        %1351 = vmatpush1.bf16.msra.mxu0 0
        %1352 = vmatprep.subr.bf16.mxu0 0
        %1353 = vmatpush1.bf16.msra.mxu0 0
        %1354 = vmatprep.subr.bf16.mxu0 0
        %1355 = vmatpush1.bf16.msra.mxu0 0
        %1356 = vmatprep.mubr.bf16.mxu0 0
        %1357 = vmatmul.mubr.bf16.gmra.mrb[0].mxu0 %v1319
        %v1358 = vpop.f32.mrb[0].mxu0
        %v1359 = vadd.f32 %v1298, %v1358
        %v1360 = vpop.f32.mrb[0].mxu0
        %v1361 = vpop.f32.mrb[0].mxu0
        %v1362 = vadd.f32 %v1301, %v1361
        %v1363 = vpop.f32.mrb[0].mxu0
        %1364 = vmatprep.mubr.bf16.mxu0 0
        %1365 = vmatmul.mubr.bf16.gmra.mrb[0].mxu0 %v1322
        %v1366 = vpop.f32.mrb[0].mxu0
        %v1367 = vadd.f32 %v1306, %v1366
        %v1368 = vpop.f32.mrb[0].mxu0
        %v1369 = vpop.f32.mrb[0].mxu0
        %v1370 = vadd.f32 %v1309, %v1369
        %v1371 = vpop.f32.mrb[0].mxu0
        %1372 = vdwg.mxu0
        %v1373 = vld [vmem:[%s4] sm:$0x1]
        %v1375 = vlaneseq
        %v1376 = vshrl.u32 %v1375, 7
        %v1377 = vsub.s32 0, %v1376
        %v1378 = vrot.slane %v1373, %v1377
        %v1380 = vadd.f32 %v1359, %v1378
        %v1381 = vadd.f32 %v1362, %v1378
        %v1382 = vadd.f32 %v1367, %v1378
        %v1383 = vadd.f32 %v1370, %v1378
        %1384 = vst.msk [vmem:[%s271] sm:$0xff] %vm304, %v1380
        %1385 = vst.msk [vmem:[%s271 + $0x8] sm:$0xff] %vm304, %v1381
        %1386 = vst.msk [vmem:[%s271 + $0x10] sm:$0xff] %vm304, %v1382
        %1387 = vst.msk [vmem:[%s271 + $0x18] sm:$0xff] %vm304, %v1383
        %s1388 = sand.u32 %s141, 1
        %s1389 = scalar_lea.sflag [#allocation4], %s1388
        %s1390 = sand.u32 %s141, 1
        %s1391 = smul.addr %s1390, 32
        %s1392 = scalar_lea.vmem [#allocation8], %s1391
        // Predicated region
        $region53: #{tpu_custom_call.1} parent=39 // pred_check
          %p1393 = pneg %p151
        $region54: #{tpu_custom_call.1} parent=39 // pred_check_branch
          %1395 = sbr.rel (%p1393) target = $region56
        $region55: #{tpu_custom_call.1} parent=39 // pred_region
          %s1396 = smul.u32 4, %s23
          %s1398 = ssub.s32 512, 512
          %1399 = vsyncadd %s1389, %s1398
          %s1400 = smul.addr %s1396, 128
          %s1401 = scalar_lea.hbm %s5, %s1400
          %s1402 = sshll.u32 %s1392, 4
          %s1403 = int_to_ptr.vmem [resolvable:$true] %s1402
          %1408 = dma.vmem_to_hbm [thread:$0]  %s1403, 512, %s1401, %s1389, 128, 128, 8
        $region56: #{tpu_custom_call.1} parent=39 // pred_fallthru
          _
      $region40: #{tpu_custom_call.1} parent=5 // pred_fallthru
        _
      %p1409 = scmp.le.s32.totalorder 2, %s18
      // Predicated region
      $region57: #{tpu_custom_call.1} parent=5 // pred_check
        %p1410 = pneg %p1409
      $region58: #{tpu_custom_call.1} parent=5 // pred_check_branch
        %1412 = sbr.rel (%p1410) target = $region60
      $region59: #{tpu_custom_call.1} parent=5 // pred_region
        %s1413 = ssub.s32 %s18, 2
        // Predicated region
        $region61: #{tpu_custom_call.1} parent=59 // pred_check
          %p1414 = pneg %p157
        $region62: #{tpu_custom_call.1} parent=59 // pred_check_branch
          %1416 = sbr.rel (%p1414) target = $region64
        $region63: #{tpu_custom_call.1} parent=59 // pred_region
          %s1417 = sand.u32 %s142, 1
          %s1418 = scalar_lea.sflag [#allocation4], %s1417
          %s1419 = sand.u32 %s142, 1
          %s1420 = smul.addr %s1419, 32
          %s1421 = scalar_lea.vmem [#allocation8], %s1420
          %1422 = dma.done %s1418, 512
        $region64: #{tpu_custom_call.1} parent=59 // pred_fallthru
          _
      $region60: #{tpu_custom_call.1} parent=5 // pred_fallthru
        _
    $region6: #{tpu_custom_call.1} parent=1 // loop_footer
      %s22 = sadd.s32 1, %s18
    $region7: #{tpu_custom_call.1} parent=1 // loop_footer_branch
      %17 = sbr.rel target = $region3
    $region8: #{tpu_custom_call.1} parent=1 // loop_exit
      _
    %1423 = vsyncpa [#allocation3], 1
    %s1424 = scalar_lea.sflag [#allocation3], 1
    %1425 = vsyncpa %s1424, 1
    %1426 = vsyncpa [#allocation6], 1
    %1427 = vsyncpa [#allocation4], 1
    %s1428 = scalar_lea.sflag [#allocation4], 1
    %1429 = vsyncpa %s1428, 1

</llo_original>
